<compile_context>
chip_gen: v7x
topology: tpu7x:2x2x1
jax: 0.10.0
libtpu: 0.0.40
codegen_flags: <defaults>
</compile_context>

<pallas_src>
import functools

import jax
import jax.numpy as jnp
from jax.experimental import pallas as pl
from jax.experimental.pallas import tpu as pltpu


# ----------------------------- Pallas kernel --------------------------------


_NT_DIMS = (((1,), (1,)), ((), ()))   # contract last dims: q @ k^T


def _encoder_layer_kernel(
    x_ref,          # (S, D)   one batch's tokens
    wqkv_ref,       # (D, 3D)  fused QKV weights (softmax scale folded into Q)
    bqkv_ref,       # (1, 3D)
    wo_ref,         # (D, D)   out-proj weights (y = x @ W layout)
    bo_ref,         # (1, D)
    w1_ref,         # (D, F)
    b1_ref,         # (1, F)
    w2_ref,         # (F, D)
    b2_ref,         # (1, D)
    g1_ref, be1_ref,  # (1, D)  LayerNorm1 gamma/beta
    g2_ref, be2_ref,  # (1, D)  LayerNorm2 gamma/beta
    o_ref,          # (S, D)
    *,
    nhead: int,
    eps: float,
):
    f32 = jnp.float32
    cd = wqkv_ref.dtype                     # MXU operand dtype (f32 or bf16)
    x = x_ref[...].astype(f32)              # (S, D)
    S, D = x.shape
    H = nhead
    hd = D // H

    # ---- (1) fused lane-dense QKV projection: one (S,D)@(D,3D) matmul -------
    qkv = jnp.dot(x.astype(cd), wqkv_ref[...],
                  preferred_element_type=f32) + bqkv_ref[...]       # (S, 3D)

    # ---- (2) per-head attention on 2-D tiles --------------------------------
    # Head split is static lane slices of the already-computed qkv; the only
    # narrow contractions left (K=hd scores, N=hd PV) are inherent to MHA.
    # At production S, replace this block with flash-style online softmax over
    # KV tiles (m/l/acc scratch) so scores are (tq, tk) instead of (S, S).
    outs = []
    for h in range(H):
        qh = qkv[:, h * hd:(h + 1) * hd]                  # (S, hd), pre-scaled
        kh = qkv[:, D + h * hd:D + (h + 1) * hd]
        vh = qkv[:, 2 * D + h * hd:2 * D + (h + 1) * hd]
        s = jax.lax.dot_general(qh.astype(cd), kh.astype(cd), _NT_DIMS,
                                preferred_element_type=f32)          # (S, S)
        m = jnp.max(s, axis=-1, keepdims=True)
        e = jnp.exp(s - m)
        p = e * pl.reciprocal(jnp.sum(e, axis=-1, keepdims=True), approx=True)
        outs.append(jnp.dot(p.astype(cd), vh.astype(cd),
                            preferred_element_type=f32))             # (S, hd)

    # ---- (3) fused output projection: concat heads, single K=D matmul -------
    o_cat = jnp.concatenate(outs, axis=-1)                           # (S, D)
    attn = jnp.dot(o_cat.astype(cd), wo_ref[...],
                   preferred_element_type=f32) + bo_ref[...]         # (S, D)

    # ---- (4) residual + LayerNorm1 (two-pass, PyTorch-equivalent) -----------
    y = x + attn
    mu = jnp.mean(y, axis=-1, keepdims=True)
    yc = y - mu
    y = yc * jax.lax.rsqrt(jnp.mean(yc * yc, axis=-1, keepdims=True) + eps)
    y = y * g1_ref[...] + be1_ref[...]

    # ---- (5) feed-forward (relu), two lane-dense matmuls --------------------
    hdn = jnp.dot(y.astype(cd), w1_ref[...],
                  preferred_element_type=f32) + b1_ref[...]          # (S, F)
    hdn = jnp.maximum(hdn, 0.0)
    hdn = jnp.dot(hdn.astype(cd), w2_ref[...],
                  preferred_element_type=f32) + b2_ref[...]          # (S, D)

    # ---- (6) residual + LayerNorm2 -------------------------------------------
    z = y + hdn
    mu2 = jnp.mean(z, axis=-1, keepdims=True)
    zc = z - mu2
    z = zc * jax.lax.rsqrt(jnp.mean(zc * zc, axis=-1, keepdims=True) + eps)
    z = z * g2_ref[...] + be2_ref[...]

    o_ref[...] = z.astype(o_ref.dtype)


# ----------------------------- wrapper ---------------------------------------


def _default_vmem_limit_bytes():
    """Generation-aware VMEM budget (48 MiB on v7x, 96 MiB on v5e/v6e)."""
    try:
        cap = int(pltpu.get_tpu_info().vmem_capacity_bytes)
    except Exception:
        cap = 128 * 1024 * 1024
    return int(min(cap * 3 // 4, 96 * 1024 * 1024))


def simplified_transformer(src, params, *, nhead, matmul_dtype=jnp.float32):
    """src: (S, B, D) float32 (PyTorch batch_first=False convention)."""
    S, B, D = src.shape
    F = params["w1"].shape[0]          # dim_feedforward
    hd = D // nhead
    eps = 1e-5
    scale = 1.0 / (float(hd) ** 0.5)
    f32 = jnp.float32

    # ---- weights in y = x @ W layout; softmax scale folded into Q cols ------
    col_scale = jnp.concatenate(
        [jnp.full((D,), scale, f32), jnp.ones((2 * D,), f32)])
    wqkv = (params["in_proj_w"].astype(f32).T * col_scale).astype(matmul_dtype)
    bqkv = (params["in_proj_b"].astype(f32) * col_scale).reshape(1, 3 * D)
    wo = params["out_proj_w"].T.astype(matmul_dtype)       # (D, D)
    bo = params["out_proj_b"].reshape(1, D).astype(f32)
    w1 = params["w1"].T.astype(matmul_dtype)               # (D, F)
    b1 = params["b1"].reshape(1, F).astype(f32)
    w2 = params["w2"].T.astype(matmul_dtype)               # (F, D)
    b2 = params["b2"].reshape(1, D).astype(f32)
    g1 = params["g1"].reshape(1, D).astype(f32)
    be1 = params["be1"].reshape(1, D).astype(f32)
    g2 = params["g2"].reshape(1, D).astype(f32)
    be2 = params["be2"].reshape(1, D).astype(f32)

    # Batch becomes a grid axis: (S, B, D) -> (B, S, D).  No (T, T) mask.
    # bf16 path also carries activations in bf16 (f32 math inside the kernel).
    act_dtype = src.dtype if matmul_dtype == jnp.float32 else matmul_dtype
    x_bsd = jnp.transpose(src, (1, 0, 2)).astype(act_dtype)

    def resident(arr):
        """Full-array block with a constant index_map -> stays VMEM-resident."""
        nd = arr.ndim
        return pl.BlockSpec(arr.shape, lambda b, _nd=nd: (0,) * _nd)

    in_specs = [
        pl.BlockSpec((None, S, D), lambda b: (b, 0, 0)),   # x: one batch/step
        resident(wqkv), resident(bqkv),
        resident(wo), resident(bo),
        resident(w1), resident(b1),
        resident(w2), resident(b2),
        resident(g1), resident(be1),
        resident(g2), resident(be2),
    ]
    out_specs = pl.BlockSpec((None, S, D), lambda b: (b, 0, 0))

    # At production sizes, additionally tile S (flash-style scores, FFN over F)
    # so per-step VMEM stays inside the budget below; the batch axis is
    # "parallel" so v7x shards grid steps across its two TensorCores.
    out = pl.pallas_call(
        functools.partial(_encoder_layer_kernel, nhead=nhead, eps=eps),
        grid=(B,),
        in_specs=in_specs,
        out_specs=out_specs,
        out_shape=jax.ShapeDtypeStruct((B, S, D), act_dtype),
        compiler_params=pltpu.CompilerParams(
            dimension_semantics=("parallel",),
            vmem_limit_bytes=_default_vmem_limit_bytes()),
    )(x_bsd, wqkv, bqkv, wo, bo, w1, b1, w2, b2, g1, be1, g2, be2)

    return jnp.transpose(out, (1, 0, 2))                   # back to (S, B, D)


# ----------------------------- pure-JAX reference ----------------------------


def reference(src, params, *, nhead):
    S, B, D = src.shape
    hd = D // nhead
    eps = 1e-5
    x = jnp.transpose(src, (1, 0, 2)).astype(jnp.float32)   # (B, S, D)

    def ln(y, g, b):
        mu = jnp.mean(y, axis=-1, keepdims=True)
        var = jnp.mean((y - mu) ** 2, axis=-1, keepdims=True)
        return (y - mu) / jnp.sqrt(var + eps) * g + b

    wq = params["in_proj_w"][:D].T
    wk = params["in_proj_w"][D:2 * D].T
    wv = params["in_proj_w"][2 * D:].T
    bq, bk, bv = (params["in_proj_b"][i * D:(i + 1) * D] for i in range(3))

    q = x @ wq + bq
    k = x @ wk + bk
    v = x @ wv + bv
    q = q.reshape(B, S, nhead, hd).transpose(0, 2, 1, 3)
    k = k.reshape(B, S, nhead, hd).transpose(0, 2, 1, 3)
    v = v.reshape(B, S, nhead, hd).transpose(0, 2, 1, 3)
    s = jnp.einsum("bhqd,bhkd->bhqk", q, k) / jnp.sqrt(jnp.float32(hd))
    p = jax.nn.softmax(s, axis=-1)
    a = jnp.einsum("bhqk,bhkd->bhqd", p, v).transpose(0, 2, 1, 3).reshape(B, S, D)
    a = a @ params["out_proj_w"].T + params["out_proj_b"]

    y = ln(x + a, params["g1"], params["be1"])
    h = jnp.maximum(y @ params["w1"].T + params["b1"], 0.0)
    h = h @ params["w2"].T + params["b2"]
    z = ln(y + h, params["g2"], params["be2"])
    return jnp.transpose(z, (1, 0, 2))


# ----------------------------- main -----------------------------------------


if __name__ == "__main__":
    S, B, D = 8, 2, 32          # seq, batch, d_model
    NHEAD = 4
    FF = 64                     # dim_feedforward (small in place of 2048)

    key = jax.random.PRNGKey(0)
    keys = jax.random.split(key, 9)

    params = {
        "in_proj_w": jax.random.normal(keys[0], (3 * D, D), jnp.float32) * 0.1,
        "in_proj_b": jax.random.normal(keys[1], (3 * D,), jnp.float32) * 0.1,
        "out_proj_w": jax.random.normal(keys[2], (D, D), jnp.float32) * 0.1,
        "out_proj_b": jax.random.normal(keys[3], (D,), jnp.float32) * 0.1,
        "w1": jax.random.normal(keys[4], (FF, D), jnp.float32) * 0.1,
        "b1": jax.random.normal(keys[5], (FF,), jnp.float32) * 0.1,
        "w2": jax.random.normal(keys[6], (D, FF), jnp.float32) * 0.1,
        "b2": jax.random.normal(keys[7], (D,), jnp.float32) * 0.1,
        # LayerNorm params as initialized by PyTorch (ones / zeros).
        "g1": jnp.ones((D,), jnp.float32),
        "be1": jnp.zeros((D,), jnp.float32),
        "g2": jnp.ones((D,), jnp.float32),
        "be2": jnp.zeros((D,), jnp.float32),
    }

    src = jax.random.normal(keys[8], (S, B, D), jnp.float32)

    ref = jax.block_until_ready(reference(src, params, nhead=NHEAD))

    # f32 MXU path (tolerance covers the EUP approximate reciprocal ~1e-3 rel).
    out = jax.block_until_ready(simplified_transformer(src, params, nhead=NHEAD))
    assert out.shape == (S, B, D)
    assert jnp.allclose(out, ref, atol=5e-3, rtol=5e-3), (
        "f32 mismatch, max abs diff = %g" % float(jnp.max(jnp.abs(out - ref))))

    # bf16 MXU + bf16 activation-I/O path (v6e/v7x); f32 accumulation/softmax/LN.
    out_bf16 = jax.block_until_ready(
        simplified_transformer(src, params, nhead=NHEAD,
                               matmul_dtype=jnp.bfloat16))
    out_bf16 = out_bf16.astype(jnp.float32)
    assert jnp.allclose(out_bf16, ref, atol=1e-1, rtol=1e-1), (
        "bf16 mismatch, max abs diff = %g"
        % float(jnp.max(jnp.abs(out_bf16 - ref))))

    print("KERNEL_OK")
</pallas_src>

<mosaic_0001>
module attributes {stable_mosaic.version = 11 : i64} {
  func.func @_encoder_layer_kernel(%arg0: i32, %arg1: memref<1x8x32xf32, #tpu.memory_space<vmem>>, %arg2: memref<32x96xf32, #tpu.memory_space<vmem>>, %arg3: memref<1x96xf32, #tpu.memory_space<vmem>>, %arg4: memref<32x32xf32, #tpu.memory_space<vmem>>, %arg5: memref<1x32xf32, #tpu.memory_space<vmem>>, %arg6: memref<32x64xf32, #tpu.memory_space<vmem>>, %arg7: memref<1x64xf32, #tpu.memory_space<vmem>>, %arg8: memref<64x32xf32, #tpu.memory_space<vmem>>, %arg9: memref<1x32xf32, #tpu.memory_space<vmem>>, %arg10: memref<1x32xf32, #tpu.memory_space<vmem>>, %arg11: memref<1x32xf32, #tpu.memory_space<vmem>>, %arg12: memref<1x32xf32, #tpu.memory_space<vmem>>, %arg13: memref<1x32xf32, #tpu.memory_space<vmem>>, %arg14: memref<1x8x32xf32, #tpu.memory_space<vmem>>) attributes {dimension_semantics = [#tpu.dimension_semantics<parallel>], iteration_bounds = array<i64: 2>, scalar_prefetch = 0 : i64, scratch_operands = 0 : i64, tpu.core_type = #tpu.core_type<tc>, window_params = [{transform_indices = @transform_0, window_bounds = array<i64: 1, 8, 32>}, {pipeline_mode = #tpu.pipeline_mode<synchronous>, transform_indices = @transform_1, window_bounds = array<i64: 32, 96>}, {pipeline_mode = #tpu.pipeline_mode<synchronous>, transform_indices = @transform_2, window_bounds = array<i64: 1, 96>}, {pipeline_mode = #tpu.pipeline_mode<synchronous>, transform_indices = @transform_3, window_bounds = array<i64: 32, 32>}, {pipeline_mode = #tpu.pipeline_mode<synchronous>, transform_indices = @transform_4, window_bounds = array<i64: 1, 32>}, {pipeline_mode = #tpu.pipeline_mode<synchronous>, transform_indices = @transform_5, window_bounds = array<i64: 32, 64>}, {pipeline_mode = #tpu.pipeline_mode<synchronous>, transform_indices = @transform_6, window_bounds = array<i64: 1, 64>}, {pipeline_mode = #tpu.pipeline_mode<synchronous>, transform_indices = @transform_7, window_bounds = array<i64: 64, 32>}, {pipeline_mode = #tpu.pipeline_mode<synchronous>, transform_indices = @transform_8, window_bounds = array<i64: 1, 32>}, {pipeline_mode = #tpu.pipeline_mode<synchronous>, transform_indices = @transform_9, window_bounds = array<i64: 1, 32>}, {pipeline_mode = #tpu.pipeline_mode<synchronous>, transform_indices = @transform_10, window_bounds = array<i64: 1, 32>}, {pipeline_mode = #tpu.pipeline_mode<synchronous>, transform_indices = @transform_11, window_bounds = array<i64: 1, 32>}, {pipeline_mode = #tpu.pipeline_mode<synchronous>, transform_indices = @transform_12, window_bounds = array<i64: 1, 32>}, {transform_indices = @transform_13, window_bounds = array<i64: 1, 8, 32>}]} {
    %c0 = arith.constant 0 : index
    %c0_0 = arith.constant 0 : index
    %c0_1 = arith.constant 0 : index
    %0 = vector.load %arg1[%c0, %c0_0, %c0_1] : memref<1x8x32xf32, #tpu.memory_space<vmem>>, vector<1x8x32xf32>
    %1 = vector.shape_cast %0 : vector<1x8x32xf32> to vector<8x32xf32>
    %c0_2 = arith.constant 0 : index
    %c0_3 = arith.constant 0 : index
    %2 = vector.load %arg2[%c0_2, %c0_3] : memref<32x96xf32, #tpu.memory_space<vmem>>, vector<32x96xf32>
    %cst = arith.constant dense<0.000000e+00> : vector<8x96xf32>
    %3 = tpu.matmul %1, %2, %cst {dimension_numbers = #tpu.dot_dimension_numbers<[1], [0], [0], [1], [0, 0, 1, 1], [], []>} : vector<8x32xf32>, vector<32x96xf32>, vector<8x96xf32> -> vector<8x96xf32>
    %c0_4 = arith.constant 0 : index
    %c0_5 = arith.constant 0 : index
    %4 = vector.load %arg3[%c0_4, %c0_5] : memref<1x96xf32, #tpu.memory_space<vmem>>, vector<1x96xf32>
    %5 = vector.broadcast %4 : vector<1x96xf32> to vector<8x96xf32>
    %6 = arith.addf %3, %5 : vector<8x96xf32>
    %7 = vector.extract_strided_slice %6 {offsets = [0, 0], sizes = [8, 8], strides = [1, 1]} : vector<8x96xf32> to vector<8x8xf32>
    %8 = vector.extract_strided_slice %6 {offsets = [0, 32], sizes = [8, 8], strides = [1, 1]} : vector<8x96xf32> to vector<8x8xf32>
    %9 = vector.extract_strided_slice %6 {offsets = [0, 64], sizes = [8, 8], strides = [1, 1]} : vector<8x96xf32> to vector<8x8xf32>
    %cst_6 = arith.constant dense<0.000000e+00> : vector<8x8xf32>
    %10 = tpu.matmul %7, %8, %cst_6 {dimension_numbers = #tpu.dot_dimension_numbers<[1], [1], [0], [0], [0, 0, 1, 0], [], []>} : vector<8x8xf32>, vector<8x8xf32>, vector<8x8xf32> -> vector<8x8xf32>
    %cst_7 = arith.constant dense<0xFF800000> : vector<8xf32>
    %11 = vector.multi_reduction <maximumf>, %10, %cst_7 [1] : vector<8x8xf32> to vector<8xf32>
    %12 = vector.shape_cast %11 : vector<8xf32> to vector<8x1xf32>
    %13 = vector.broadcast %12 : vector<8x1xf32> to vector<8x8xf32>
    %14 = arith.subf %10, %13 : vector<8x8xf32>
    %15 = math.exp %14 : vector<8x8xf32>
    %cst_8 = arith.constant dense<0.000000e+00> : vector<8xf32>
    %16 = vector.multi_reduction <add>, %15, %cst_8 [1] : vector<8x8xf32> to vector<8xf32>
    %17 = vector.shape_cast %16 : vector<8xf32> to vector<8x1xf32>
    %18 = tpu.reciprocal %17 {approx = true} : vector<8x1xf32> -> vector<8x1xf32>
    %19 = vector.broadcast %18 : vector<8x1xf32> to vector<8x8xf32>
    %20 = arith.mulf %15, %19 : vector<8x8xf32>
    %cst_9 = arith.constant dense<0.000000e+00> : vector<8x8xf32>
    %21 = tpu.matmul %20, %9, %cst_9 {dimension_numbers = #tpu.dot_dimension_numbers<[1], [0], [0], [1], [0, 0, 1, 1], [], []>} : vector<8x8xf32>, vector<8x8xf32>, vector<8x8xf32> -> vector<8x8xf32>
    %22 = vector.extract_strided_slice %6 {offsets = [0, 8], sizes = [8, 8], strides = [1, 1]} : vector<8x96xf32> to vector<8x8xf32>
    %23 = vector.extract_strided_slice %6 {offsets = [0, 40], sizes = [8, 8], strides = [1, 1]} : vector<8x96xf32> to vector<8x8xf32>
    %24 = vector.extract_strided_slice %6 {offsets = [0, 72], sizes = [8, 8], strides = [1, 1]} : vector<8x96xf32> to vector<8x8xf32>
    %cst_10 = arith.constant dense<0.000000e+00> : vector<8x8xf32>
    %25 = tpu.matmul %22, %23, %cst_10 {dimension_numbers = #tpu.dot_dimension_numbers<[1], [1], [0], [0], [0, 0, 1, 0], [], []>} : vector<8x8xf32>, vector<8x8xf32>, vector<8x8xf32> -> vector<8x8xf32>
    %cst_11 = arith.constant dense<0xFF800000> : vector<8xf32>
    %26 = vector.multi_reduction <maximumf>, %25, %cst_11 [1] : vector<8x8xf32> to vector<8xf32>
    %27 = vector.shape_cast %26 : vector<8xf32> to vector<8x1xf32>
    %28 = vector.broadcast %27 : vector<8x1xf32> to vector<8x8xf32>
    %29 = arith.subf %25, %28 : vector<8x8xf32>
    %30 = math.exp %29 : vector<8x8xf32>
    %cst_12 = arith.constant dense<0.000000e+00> : vector<8xf32>
    %31 = vector.multi_reduction <add>, %30, %cst_12 [1] : vector<8x8xf32> to vector<8xf32>
    %32 = vector.shape_cast %31 : vector<8xf32> to vector<8x1xf32>
    %33 = tpu.reciprocal %32 {approx = true} : vector<8x1xf32> -> vector<8x1xf32>
    %34 = vector.broadcast %33 : vector<8x1xf32> to vector<8x8xf32>
    %35 = arith.mulf %30, %34 : vector<8x8xf32>
    %cst_13 = arith.constant dense<0.000000e+00> : vector<8x8xf32>
    %36 = tpu.matmul %35, %24, %cst_13 {dimension_numbers = #tpu.dot_dimension_numbers<[1], [0], [0], [1], [0, 0, 1, 1], [], []>} : vector<8x8xf32>, vector<8x8xf32>, vector<8x8xf32> -> vector<8x8xf32>
    %37 = vector.extract_strided_slice %6 {offsets = [0, 16], sizes = [8, 8], strides = [1, 1]} : vector<8x96xf32> to vector<8x8xf32>
    %38 = vector.extract_strided_slice %6 {offsets = [0, 48], sizes = [8, 8], strides = [1, 1]} : vector<8x96xf32> to vector<8x8xf32>
    %39 = vector.extract_strided_slice %6 {offsets = [0, 80], sizes = [8, 8], strides = [1, 1]} : vector<8x96xf32> to vector<8x8xf32>
    %cst_14 = arith.constant dense<0.000000e+00> : vector<8x8xf32>
    %40 = tpu.matmul %37, %38, %cst_14 {dimension_numbers = #tpu.dot_dimension_numbers<[1], [1], [0], [0], [0, 0, 1, 0], [], []>} : vector<8x8xf32>, vector<8x8xf32>, vector<8x8xf32> -> vector<8x8xf32>
    %cst_15 = arith.constant dense<0xFF800000> : vector<8xf32>
    %41 = vector.multi_reduction <maximumf>, %40, %cst_15 [1] : vector<8x8xf32> to vector<8xf32>
    %42 = vector.shape_cast %41 : vector<8xf32> to vector<8x1xf32>
    %43 = vector.broadcast %42 : vector<8x1xf32> to vector<8x8xf32>
    %44 = arith.subf %40, %43 : vector<8x8xf32>
    %45 = math.exp %44 : vector<8x8xf32>
    %cst_16 = arith.constant dense<0.000000e+00> : vector<8xf32>
    %46 = vector.multi_reduction <add>, %45, %cst_16 [1] : vector<8x8xf32> to vector<8xf32>
    %47 = vector.shape_cast %46 : vector<8xf32> to vector<8x1xf32>
    %48 = tpu.reciprocal %47 {approx = true} : vector<8x1xf32> -> vector<8x1xf32>
    %49 = vector.broadcast %48 : vector<8x1xf32> to vector<8x8xf32>
    %50 = arith.mulf %45, %49 : vector<8x8xf32>
    %cst_17 = arith.constant dense<0.000000e+00> : vector<8x8xf32>
    %51 = tpu.matmul %50, %39, %cst_17 {dimension_numbers = #tpu.dot_dimension_numbers<[1], [0], [0], [1], [0, 0, 1, 1], [], []>} : vector<8x8xf32>, vector<8x8xf32>, vector<8x8xf32> -> vector<8x8xf32>
    %52 = vector.extract_strided_slice %6 {offsets = [0, 24], sizes = [8, 8], strides = [1, 1]} : vector<8x96xf32> to vector<8x8xf32>
    %53 = vector.extract_strided_slice %6 {offsets = [0, 56], sizes = [8, 8], strides = [1, 1]} : vector<8x96xf32> to vector<8x8xf32>
    %54 = vector.extract_strided_slice %6 {offsets = [0, 88], sizes = [8, 8], strides = [1, 1]} : vector<8x96xf32> to vector<8x8xf32>
    %cst_18 = arith.constant dense<0.000000e+00> : vector<8x8xf32>
    %55 = tpu.matmul %52, %53, %cst_18 {dimension_numbers = #tpu.dot_dimension_numbers<[1], [1], [0], [0], [0, 0, 1, 0], [], []>} : vector<8x8xf32>, vector<8x8xf32>, vector<8x8xf32> -> vector<8x8xf32>
    %cst_19 = arith.constant dense<0xFF800000> : vector<8xf32>
    %56 = vector.multi_reduction <maximumf>, %55, %cst_19 [1] : vector<8x8xf32> to vector<8xf32>
    %57 = vector.shape_cast %56 : vector<8xf32> to vector<8x1xf32>
    %58 = vector.broadcast %57 : vector<8x1xf32> to vector<8x8xf32>
    %59 = arith.subf %55, %58 : vector<8x8xf32>
    %60 = math.exp %59 : vector<8x8xf32>
    %cst_20 = arith.constant dense<0.000000e+00> : vector<8xf32>
    %61 = vector.multi_reduction <add>, %60, %cst_20 [1] : vector<8x8xf32> to vector<8xf32>
    %62 = vector.shape_cast %61 : vector<8xf32> to vector<8x1xf32>
    %63 = tpu.reciprocal %62 {approx = true} : vector<8x1xf32> -> vector<8x1xf32>
    %64 = vector.broadcast %63 : vector<8x1xf32> to vector<8x8xf32>
    %65 = arith.mulf %60, %64 : vector<8x8xf32>
    %cst_21 = arith.constant dense<0.000000e+00> : vector<8x8xf32>
    %66 = tpu.matmul %65, %54, %cst_21 {dimension_numbers = #tpu.dot_dimension_numbers<[1], [0], [0], [1], [0, 0, 1, 1], [], []>} : vector<8x8xf32>, vector<8x8xf32>, vector<8x8xf32> -> vector<8x8xf32>
    %67 = tpu.concatenate %21, %36, %51, %66 in 1 : vector<8x8xf32>, vector<8x8xf32>, vector<8x8xf32>, vector<8x8xf32> -> vector<8x32xf32>
    %c0_22 = arith.constant 0 : index
    %c0_23 = arith.constant 0 : index
    %68 = vector.load %arg4[%c0_22, %c0_23] : memref<32x32xf32, #tpu.memory_space<vmem>>, vector<32x32xf32>
    %cst_24 = arith.constant dense<0.000000e+00> : vector<8x32xf32>
    %69 = tpu.matmul %67, %68, %cst_24 {dimension_numbers = #tpu.dot_dimension_numbers<[1], [0], [0], [1], [0, 0, 1, 1], [], []>} : vector<8x32xf32>, vector<32x32xf32>, vector<8x32xf32> -> vector<8x32xf32>
    %c0_25 = arith.constant 0 : index
    %c0_26 = arith.constant 0 : index
    %70 = vector.load %arg5[%c0_25, %c0_26] : memref<1x32xf32, #tpu.memory_space<vmem>>, vector<1x32xf32>
    %71 = vector.broadcast %70 : vector<1x32xf32> to vector<8x32xf32>
    %72 = arith.addf %69, %71 : vector<8x32xf32>
    %73 = arith.addf %1, %72 : vector<8x32xf32>
    %cst_27 = arith.constant dense<0.000000e+00> : vector<8xf32>
    %74 = vector.multi_reduction <add>, %73, %cst_27 [1] : vector<8x32xf32> to vector<8xf32>
    %75 = vector.shape_cast %74 : vector<8xf32> to vector<8x1xf32>
    %cst_28 = arith.constant 3.200000e+01 : f32
    %76 = vector.broadcast %cst_28 : f32 to vector<8x1xf32>
    %77 = arith.divf %75, %76 : vector<8x1xf32>
    %78 = vector.broadcast %77 : vector<8x1xf32> to vector<8x32xf32>
    %79 = arith.subf %73, %78 : vector<8x32xf32>
    %80 = arith.mulf %79, %79 : vector<8x32xf32>
    %cst_29 = arith.constant dense<0.000000e+00> : vector<8xf32>
    %81 = vector.multi_reduction <add>, %80, %cst_29 [1] : vector<8x32xf32> to vector<8xf32>
    %82 = vector.shape_cast %81 : vector<8xf32> to vector<8x1xf32>
    %cst_30 = arith.constant 3.200000e+01 : f32
    %83 = vector.broadcast %cst_30 : f32 to vector<8x1xf32>
    %84 = arith.divf %82, %83 : vector<8x1xf32>
    %cst_31 = arith.constant 9.99999974E-6 : f32
    %85 = vector.broadcast %cst_31 : f32 to vector<8x1xf32>
    %86 = arith.addf %84, %85 : vector<8x1xf32>
    %87 = math.rsqrt %86 : vector<8x1xf32>
    %88 = vector.broadcast %87 : vector<8x1xf32> to vector<8x32xf32>
    %89 = arith.mulf %79, %88 : vector<8x32xf32>
    %c0_32 = arith.constant 0 : index
    %c0_33 = arith.constant 0 : index
    %90 = vector.load %arg10[%c0_32, %c0_33] : memref<1x32xf32, #tpu.memory_space<vmem>>, vector<1x32xf32>
    %91 = vector.broadcast %90 : vector<1x32xf32> to vector<8x32xf32>
    %92 = arith.mulf %89, %91 : vector<8x32xf32>
    %c0_34 = arith.constant 0 : index
    %c0_35 = arith.constant 0 : index
    %93 = vector.load %arg11[%c0_34, %c0_35] : memref<1x32xf32, #tpu.memory_space<vmem>>, vector<1x32xf32>
    %94 = vector.broadcast %93 : vector<1x32xf32> to vector<8x32xf32>
    %95 = arith.addf %92, %94 : vector<8x32xf32>
    %c0_36 = arith.constant 0 : index
    %c0_37 = arith.constant 0 : index
    %96 = vector.load %arg6[%c0_36, %c0_37] : memref<32x64xf32, #tpu.memory_space<vmem>>, vector<32x64xf32>
    %cst_38 = arith.constant dense<0.000000e+00> : vector<8x64xf32>
    %97 = tpu.matmul %95, %96, %cst_38 {dimension_numbers = #tpu.dot_dimension_numbers<[1], [0], [0], [1], [0, 0, 1, 1], [], []>} : vector<8x32xf32>, vector<32x64xf32>, vector<8x64xf32> -> vector<8x64xf32>
    %c0_39 = arith.constant 0 : index
    %c0_40 = arith.constant 0 : index
    %98 = vector.load %arg7[%c0_39, %c0_40] : memref<1x64xf32, #tpu.memory_space<vmem>>, vector<1x64xf32>
    %99 = vector.broadcast %98 : vector<1x64xf32> to vector<8x64xf32>
    %100 = arith.addf %97, %99 : vector<8x64xf32>
    %cst_41 = arith.constant 0.000000e+00 : f32
    %101 = vector.broadcast %cst_41 : f32 to vector<8x64xf32>
    %102 = arith.maximumf %100, %101 : vector<8x64xf32>
    %c0_42 = arith.constant 0 : index
    %c0_43 = arith.constant 0 : index
    %103 = vector.load %arg8[%c0_42, %c0_43] : memref<64x32xf32, #tpu.memory_space<vmem>>, vector<64x32xf32>
    %cst_44 = arith.constant dense<0.000000e+00> : vector<8x32xf32>
    %104 = tpu.matmul %102, %103, %cst_44 {dimension_numbers = #tpu.dot_dimension_numbers<[1], [0], [0], [1], [0, 0, 1, 1], [], []>} : vector<8x64xf32>, vector<64x32xf32>, vector<8x32xf32> -> vector<8x32xf32>
    %c0_45 = arith.constant 0 : index
    %c0_46 = arith.constant 0 : index
    %105 = vector.load %arg9[%c0_45, %c0_46] : memref<1x32xf32, #tpu.memory_space<vmem>>, vector<1x32xf32>
    %106 = vector.broadcast %105 : vector<1x32xf32> to vector<8x32xf32>
    %107 = arith.addf %104, %106 : vector<8x32xf32>
    %108 = arith.addf %95, %107 : vector<8x32xf32>
    %cst_47 = arith.constant dense<0.000000e+00> : vector<8xf32>
    %109 = vector.multi_reduction <add>, %108, %cst_47 [1] : vector<8x32xf32> to vector<8xf32>
    %110 = vector.shape_cast %109 : vector<8xf32> to vector<8x1xf32>
    %cst_48 = arith.constant 3.200000e+01 : f32
    %111 = vector.broadcast %cst_48 : f32 to vector<8x1xf32>
    %112 = arith.divf %110, %111 : vector<8x1xf32>
    %113 = vector.broadcast %112 : vector<8x1xf32> to vector<8x32xf32>
    %114 = arith.subf %108, %113 : vector<8x32xf32>
    %115 = arith.mulf %114, %114 : vector<8x32xf32>
    %cst_49 = arith.constant dense<0.000000e+00> : vector<8xf32>
    %116 = vector.multi_reduction <add>, %115, %cst_49 [1] : vector<8x32xf32> to vector<8xf32>
    %117 = vector.shape_cast %116 : vector<8xf32> to vector<8x1xf32>
    %cst_50 = arith.constant 3.200000e+01 : f32
    %118 = vector.broadcast %cst_50 : f32 to vector<8x1xf32>
    %119 = arith.divf %117, %118 : vector<8x1xf32>
    %cst_51 = arith.constant 9.99999974E-6 : f32
    %120 = vector.broadcast %cst_51 : f32 to vector<8x1xf32>
    %121 = arith.addf %119, %120 : vector<8x1xf32>
    %122 = math.rsqrt %121 : vector<8x1xf32>
    %123 = vector.broadcast %122 : vector<8x1xf32> to vector<8x32xf32>
    %124 = arith.mulf %114, %123 : vector<8x32xf32>
    %c0_52 = arith.constant 0 : index
    %c0_53 = arith.constant 0 : index
    %125 = vector.load %arg12[%c0_52, %c0_53] : memref<1x32xf32, #tpu.memory_space<vmem>>, vector<1x32xf32>
    %126 = vector.broadcast %125 : vector<1x32xf32> to vector<8x32xf32>
    %127 = arith.mulf %124, %126 : vector<8x32xf32>
    %c0_54 = arith.constant 0 : index
    %c0_55 = arith.constant 0 : index
    %128 = vector.load %arg13[%c0_54, %c0_55] : memref<1x32xf32, #tpu.memory_space<vmem>>, vector<1x32xf32>
    %129 = vector.broadcast %128 : vector<1x32xf32> to vector<8x32xf32>
    %130 = arith.addf %127, %129 : vector<8x32xf32>
    %c0_56 = arith.constant 0 : index
    %c0_57 = arith.constant 0 : index
    %c0_58 = arith.constant 0 : index
    %131 = vector.load %arg14[%c0_56, %c0_57, %c0_58] : memref<1x8x32xf32, #tpu.memory_space<vmem>>, vector<1x8x32xf32>
    %132 = vector.shape_cast %131 : vector<1x8x32xf32> to vector<8x32xf32>
    %133 = vector.shape_cast %130 : vector<8x32xf32> to vector<1x8x32xf32>
    tpu.vector_store %arg14[%c0_56, %c0_57, %c0_58], %133 {strides = array<i32>} : memref<1x8x32xf32, #tpu.memory_space<vmem>>, vector<1x8x32xf32>,
    return
  }
  func.func @transform_0(%arg0: i32) -> (i32, i32, i32) {
    %c0_i32 = arith.constant 0 : i32
    %c0_i32_0 = arith.constant 0 : i32
    %c0_i32_1 = arith.constant 0 : i32
    return %arg0, %c0_i32, %c0_i32_0 : i32, i32, i32
  }
  func.func @transform_1(%arg0: i32) -> (i32, i32) {
    %c0_i32 = arith.constant 0 : i32
    %c0_i32_0 = arith.constant 0 : i32
    %c0_i32_1 = arith.constant 0 : i32
    return %c0_i32, %c0_i32_0 : i32, i32
  }
  func.func @transform_2(%arg0: i32) -> (i32, i32) {
    %c0_i32 = arith.constant 0 : i32
    %c0_i32_0 = arith.constant 0 : i32
    %c0_i32_1 = arith.constant 0 : i32
    return %c0_i32, %c0_i32_0 : i32, i32
  }
  func.func @transform_3(%arg0: i32) -> (i32, i32) {
    %c0_i32 = arith.constant 0 : i32
    %c0_i32_0 = arith.constant 0 : i32
    %c0_i32_1 = arith.constant 0 : i32
    return %c0_i32, %c0_i32_0 : i32, i32
  }
  func.func @transform_4(%arg0: i32) -> (i32, i32) {
    %c0_i32 = arith.constant 0 : i32
    %c0_i32_0 = arith.constant 0 : i32
    %c0_i32_1 = arith.constant 0 : i32
    return %c0_i32, %c0_i32_0 : i32, i32
  }
  func.func @transform_5(%arg0: i32) -> (i32, i32) {
    %c0_i32 = arith.constant 0 : i32
    %c0_i32_0 = arith.constant 0 : i32
    %c0_i32_1 = arith.constant 0 : i32
    return %c0_i32, %c0_i32_0 : i32, i32
  }
  func.func @transform_6(%arg0: i32) -> (i32, i32) {
    %c0_i32 = arith.constant 0 : i32
    %c0_i32_0 = arith.constant 0 : i32
    %c0_i32_1 = arith.constant 0 : i32
    return %c0_i32, %c0_i32_0 : i32, i32
  }
  func.func @transform_7(%arg0: i32) -> (i32, i32) {
    %c0_i32 = arith.constant 0 : i32
    %c0_i32_0 = arith.constant 0 : i32
    %c0_i32_1 = arith.constant 0 : i32
    return %c0_i32, %c0_i32_0 : i32, i32
  }
  func.func @transform_8(%arg0: i32) -> (i32, i32) {
    %c0_i32 = arith.constant 0 : i32
    %c0_i32_0 = arith.constant 0 : i32
    %c0_i32_1 = arith.constant 0 : i32
    return %c0_i32, %c0_i32_0 : i32, i32
  }
  func.func @transform_9(%arg0: i32) -> (i32, i32) {
    %c0_i32 = arith.constant 0 : i32
    %c0_i32_0 = arith.constant 0 : i32
    %c0_i32_1 = arith.constant 0 : i32
    return %c0_i32, %c0_i32_0 : i32, i32
  }
  func.func @transform_10(%arg0: i32) -> (i32, i32) {
    %c0_i32 = arith.constant 0 : i32
    %c0_i32_0 = arith.constant 0 : i32
    %c0_i32_1 = arith.constant 0 : i32
    return %c0_i32, %c0_i32_0 : i32, i32
  }
  func.func @transform_11(%arg0: i32) -> (i32, i32) {
    %c0_i32 = arith.constant 0 : i32
    %c0_i32_0 = arith.constant 0 : i32
    %c0_i32_1 = arith.constant 0 : i32
    return %c0_i32, %c0_i32_0 : i32, i32
  }
  func.func @transform_12(%arg0: i32) -> (i32, i32) {
    %c0_i32 = arith.constant 0 : i32
    %c0_i32_0 = arith.constant 0 : i32
    %c0_i32_1 = arith.constant 0 : i32
    return %c0_i32, %c0_i32_0 : i32, i32
  }
  func.func @transform_13(%arg0: i32) -> (i32, i32, i32) {
    %c0_i32 = arith.constant 0 : i32
    %c0_i32_0 = arith.constant 0 : i32
    %c0_i32_1 = arith.constant 0 : i32
    return %arg0, %c0_i32, %c0_i32_0 : i32, i32, i32
  }
}

</mosaic_0001>

<llo_original>
// kernel: tpu_custom_call.1
$region0: #{tpu_custom_call.1}
  #allocation0 [shape = 'u32[]', space=smem, size = 0x4, offset = 0x4, fixed_abs, tag = 'smem constant byte address 0x4 - core index']
  #allocation1 [shape = 'u32[144,128]{1,0:T(1,128)}', space=vmem, size = 0x12000, scoped, tag = 'internal scratch']
  %s0 = inlined_call_operand.hbm [shape: f32[2,8,32], index: 0, kind: input, shape index: {}]
  %s1 = inlined_call_operand.hbm [shape: f32[32,96], index: 1, kind: input, shape index: {}]
  %s2 = inlined_call_operand.hbm [shape: f32[1,96], index: 2, kind: input, shape index: {}]
  %s3 = inlined_call_operand.hbm [shape: f32[32,32], index: 3, kind: input, shape index: {}]
  %s4 = inlined_call_operand.hbm [shape: f32[1,32], index: 4, kind: input, shape index: {}]
  %s5 = inlined_call_operand.hbm [shape: f32[32,64], index: 5, kind: input, shape index: {}]
  %s6 = inlined_call_operand.hbm [shape: f32[1,64], index: 6, kind: input, shape index: {}]
  %s7 = inlined_call_operand.hbm [shape: f32[64,32], index: 7, kind: input, shape index: {}]
  %s8 = inlined_call_operand.hbm [shape: f32[1,32], index: 8, kind: input, shape index: {}]
  %s9 = inlined_call_operand.hbm [shape: f32[1,32], index: 9, kind: input, shape index: {}]
  %s10 = inlined_call_operand.hbm [shape: f32[1,32], index: 10, kind: input, shape index: {}]
  %s11 = inlined_call_operand.hbm [shape: f32[1,32], index: 11, kind: input, shape index: {}]
  %s12 = inlined_call_operand.hbm [shape: f32[1,32], index: 12, kind: input, shape index: {}]
  %s13 = inlined_call_operand.hbm [shape: f32[2,8,32], index: 13, kind: output, shape index: {}]
  %s14 = sld [smem:[#allocation0]]
  $region137: #{tpu_custom_call.1} parent=0
    _
  %s16 = ssub.s32 1, %s14
  %s17 = scalar_select 0, %s16, %s14
  $region1: #{tpu_custom_call.1} parent=0
    #allocation2 [shape = 'u8[8192]{0}', space=vmem, size = 0x2000, scoped, tag = 'input window, operand 0']
    #allocation3 [shape = 's32[2]{0}', space=sflag, size = 0x8, scoped, tag = 'scoped memory for tpu_custom_call.1']
    #allocation4 [shape = 's32[2]{0}', space=sflag, size = 0x8, scoped, tag = 'scoped memory for tpu_custom_call.1']
    #allocation5 [shape = 'u8[16384]{0}', space=vmem, size = 0x4000, scoped, tag = 'input window, operand 1, single buffered']
    #allocation6 [shape = 's32[1]{0}', space=sflag, size = 0x4, scoped, tag = 'scoped memory for tpu_custom_call.1']
    #allocation7 [shape = 'u8[512]{0}', space=vmem, size = 0x400, scoped, tag = 'input window, operand 2, single buffered']
    #allocation8 [shape = 'u8[16384]{0}', space=vmem, size = 0x4000, scoped, tag = 'input window, operand 3, single buffered']
    #allocation9 [shape = 's32[1]{0}', space=sflag, size = 0x4, scoped, tag = 'scoped memory for tpu_custom_call.1']
    #allocation10 [shape = 'u8[512]{0}', space=vmem, size = 0x400, scoped, tag = 'input window, operand 4, single buffered']
    #allocation11 [shape = 'u8[16384]{0}', space=vmem, size = 0x4000, scoped, tag = 'input window, operand 5, single buffered']
    #allocation12 [shape = 's32[1]{0}', space=sflag, size = 0x4, scoped, tag = 'scoped memory for tpu_custom_call.1']
    #allocation13 [shape = 'u8[512]{0}', space=vmem, size = 0x400, scoped, tag = 'input window, operand 6, single buffered']
    #allocation14 [shape = 'u8[32768]{0}', space=vmem, size = 0x8000, scoped, tag = 'input window, operand 7, single buffered']
    #allocation15 [shape = 's32[1]{0}', space=sflag, size = 0x4, scoped, tag = 'scoped memory for tpu_custom_call.1']
    #allocation16 [shape = 'u8[512]{0}', space=vmem, size = 0x400, scoped, tag = 'input window, operand 8, single buffered']
    #allocation17 [shape = 'u8[512]{0}', space=vmem, size = 0x400, scoped, tag = 'input window, operand 9, single buffered']
    #allocation18 [shape = 's32[1]{0}', space=sflag, size = 0x4, scoped, tag = 'scoped memory for tpu_custom_call.1']
    #allocation19 [shape = 'u8[512]{0}', space=vmem, size = 0x400, scoped, tag = 'input window, operand 10, single buffered']
    #allocation20 [shape = 'u8[512]{0}', space=vmem, size = 0x400, scoped, tag = 'input window, operand 11, single buffered']
    #allocation21 [shape = 's32[1]{0}', space=sflag, size = 0x4, scoped, tag = 'scoped memory for tpu_custom_call.1']
    #allocation22 [shape = 'u8[512]{0}', space=vmem, size = 0x400, scoped, tag = 'input window, operand 12, single buffered']
    #allocation23 [shape = 'u8[8192]{0}', space=vmem, size = 0x2000, scoped, tag = 'output window, operand 0']
    %18 = vsyncpa [#allocation3], 0
    %s19 = scalar_lea.sflag [#allocation3], 1
    %20 = vsyncpa %s19, 0
    %21 = vsyncpa [#allocation6], 0
    %22 = vsyncpa [#allocation9], 0
    %23 = vsyncpa [#allocation12], 0
    %24 = vsyncpa [#allocation15], 0
    %25 = vsyncpa [#allocation18], 0
    %26 = vsyncpa [#allocation21], 0
    %27 = vsyncpa [#allocation4], 0
    %s28 = scalar_lea.sflag [#allocation4], 1
    %29 = vsyncpa %s28, 0
    loop: start=0, step=1, limit=4
    $region2: #{tpu_custom_call.1} parent=1 // loop_pre_header
      _
    $region3: #{tpu_custom_call.1} parent=1 // loop_header
      %s31 = sphi 0, %s35
      %p32 = scmp.ge.s32.totalorder %s31, 4
      %s41 = sphi 0, %s43
      %s44 = sphi 0, %s41
      %s45 = sphi 0, %s44
      %s61 = sphi 0, %s45
      %s65 = sphi 0, %s65
      %s67 = sphi 0, %s65
      %s68 = sphi 0, %s67
      %s82 = sphi 0, %s68
      %s86 = sphi 0, %s86
      %s88 = sphi 0, %s86
      %s89 = sphi 0, %s88
      %s103 = sphi 0, %s89
      %s107 = sphi 0, %s107
      %s109 = sphi 0, %s107
      %s110 = sphi 0, %s109
      %s124 = sphi 0, %s110
      %s128 = sphi 0, %s128
      %s130 = sphi 0, %s128
      %s131 = sphi 0, %s130
      %s145 = sphi 0, %s131
      %s149 = sphi 0, %s149
      %s151 = sphi 0, %s149
      %s152 = sphi 0, %s151
      %s166 = sphi 0, %s152
      %s170 = sphi 0, %s170
      %s172 = sphi 0, %s170
      %s173 = sphi 0, %s172
      %s187 = sphi 0, %s173
      %s191 = sphi 0, %s191
      %s193 = sphi 0, %s191
      %s194 = sphi 0, %s193
      %s208 = sphi 0, %s194
      %s212 = sphi 0, %s212
      %s214 = sphi 0, %s212
      %s215 = sphi 0, %s214
      %s229 = sphi 0, %s215
      %s233 = sphi 0, %s233
      %s235 = sphi 0, %s233
      %s236 = sphi 0, %s235
      %s250 = sphi 0, %s236
      %s254 = sphi 0, %s254
      %s256 = sphi 0, %s254
      %s257 = sphi 0, %s256
      %s271 = sphi 0, %s257
      %s275 = sphi 0, %s275
      %s277 = sphi 0, %s275
      %s278 = sphi 0, %s277
      %s292 = sphi 0, %s278
      %s296 = sphi 0, %s296
      %s298 = sphi 0, %s296
      %s299 = sphi 0, %s298
      %s313 = sphi 0, %s299
      %s319 = sphi 0, %s321
      %s322 = sphi 0, %s319
      %s323 = sphi 0, %s322
      %s339 = sphi 0, %s323
    $region4: #{tpu_custom_call.1} parent=1 // loop_header_branch
      %34 = sbr.rel (%p32) target = $region8
    $region5: #{tpu_custom_call.1} parent=1 // loop_body
      %s36 = ssub.s32 %s31, 1
      %s37 = ssub.s32 %s31, 2
      %s38 = sadd.s32 %s31, 1
      %s39 = ssub.s32 %s31, %s38
      %p40 = scmp.eq.s32.totalorder %s39, 0
      %s42 = sadd.s32 %s41, 1
      %s43 = scalar_select %p40, %s41, %s42
      %p46 = pneg %p40
      %p47 = scmp.eq.s32.totalorder %s31, 1
      %p48 = por %p46, %p47
      %p49 = scmp.ne.s32.totalorder %s41, %s44
      %p50 = scmp.eq.s32.totalorder %s31, 0
      %p51 = por %p49, %p50
      %p52 = scmp.ne.s32.totalorder %s41, %s44
      %p53 = scmp.eq.s32.totalorder %s36, 1
      %p54 = por %p52, %p53
      %p55 = scmp.ne.s32.totalorder %s44, %s45
      %p56 = scmp.eq.s32.totalorder %s36, 0
      %p57 = por %p55, %p56
      %p58 = scmp.ne.s32.totalorder %s44, %s45
      %p59 = scmp.eq.s32.totalorder %s37, 1
      %p60 = por %p58, %p59
      %p62 = scmp.ne.s32.totalorder %s45, %s61
      %p63 = scmp.eq.s32.totalorder %s37, 0
      %p64 = por %p62, %p63
      %s66 = sadd.s32 %s65, 1
      %p69 = scmp.eq.s32.totalorder %s31, 1
      %p70 = scmp.ne.s32.totalorder %s65, %s67
      %p71 = scmp.eq.s32.totalorder %s31, 0
      %p72 = por %p70, %p71
      %p73 = scmp.ne.s32.totalorder %s65, %s67
      %p74 = scmp.eq.s32.totalorder %s36, 1
      %p75 = por %p73, %p74
      %p76 = scmp.ne.s32.totalorder %s67, %s68
      %p77 = scmp.eq.s32.totalorder %s36, 0
      %p78 = por %p76, %p77
      %p79 = scmp.ne.s32.totalorder %s67, %s68
      %p80 = scmp.eq.s32.totalorder %s37, 1
      %p81 = por %p79, %p80
      %p83 = scmp.ne.s32.totalorder %s68, %s82
      %p84 = scmp.eq.s32.totalorder %s37, 0
      %p85 = por %p83, %p84
      %s87 = sadd.s32 %s86, 1
      %p90 = scmp.eq.s32.totalorder %s31, 1
      %p91 = scmp.ne.s32.totalorder %s86, %s88
      %p92 = scmp.eq.s32.totalorder %s31, 0
      %p93 = por %p91, %p92
      %p94 = scmp.ne.s32.totalorder %s86, %s88
      %p95 = scmp.eq.s32.totalorder %s36, 1
      %p96 = por %p94, %p95
      %p97 = scmp.ne.s32.totalorder %s88, %s89
      %p98 = scmp.eq.s32.totalorder %s36, 0
      %p99 = por %p97, %p98
      %p100 = scmp.ne.s32.totalorder %s88, %s89
      %p101 = scmp.eq.s32.totalorder %s37, 1
      %p102 = por %p100, %p101
      %p104 = scmp.ne.s32.totalorder %s89, %s103
      %p105 = scmp.eq.s32.totalorder %s37, 0
      %p106 = por %p104, %p105
      %s108 = sadd.s32 %s107, 1
      %p111 = scmp.eq.s32.totalorder %s31, 1
      %p112 = scmp.ne.s32.totalorder %s107, %s109
      %p113 = scmp.eq.s32.totalorder %s31, 0
      %p114 = por %p112, %p113
      %p115 = scmp.ne.s32.totalorder %s107, %s109
      %p116 = scmp.eq.s32.totalorder %s36, 1
      %p117 = por %p115, %p116
      %p118 = scmp.ne.s32.totalorder %s109, %s110
      %p119 = scmp.eq.s32.totalorder %s36, 0
      %p120 = por %p118, %p119
      %p121 = scmp.ne.s32.totalorder %s109, %s110
      %p122 = scmp.eq.s32.totalorder %s37, 1
      %p123 = por %p121, %p122
      %p125 = scmp.ne.s32.totalorder %s110, %s124
      %p126 = scmp.eq.s32.totalorder %s37, 0
      %p127 = por %p125, %p126
      %s129 = sadd.s32 %s128, 1
      %p132 = scmp.eq.s32.totalorder %s31, 1
      %p133 = scmp.ne.s32.totalorder %s128, %s130
      %p134 = scmp.eq.s32.totalorder %s31, 0
      %p135 = por %p133, %p134
      %p136 = scmp.ne.s32.totalorder %s128, %s130
      %p137 = scmp.eq.s32.totalorder %s36, 1
      %p138 = por %p136, %p137
      %p139 = scmp.ne.s32.totalorder %s130, %s131
      %p140 = scmp.eq.s32.totalorder %s36, 0
      %p141 = por %p139, %p140
      %p142 = scmp.ne.s32.totalorder %s130, %s131
      %p143 = scmp.eq.s32.totalorder %s37, 1
      %p144 = por %p142, %p143
      %p146 = scmp.ne.s32.totalorder %s131, %s145
      %p147 = scmp.eq.s32.totalorder %s37, 0
      %p148 = por %p146, %p147
      %s150 = sadd.s32 %s149, 1
      %p153 = scmp.eq.s32.totalorder %s31, 1
      %p154 = scmp.ne.s32.totalorder %s149, %s151
      %p155 = scmp.eq.s32.totalorder %s31, 0
      %p156 = por %p154, %p155
      %p157 = scmp.ne.s32.totalorder %s149, %s151
      %p158 = scmp.eq.s32.totalorder %s36, 1
      %p159 = por %p157, %p158
      %p160 = scmp.ne.s32.totalorder %s151, %s152
      %p161 = scmp.eq.s32.totalorder %s36, 0
      %p162 = por %p160, %p161
      %p163 = scmp.ne.s32.totalorder %s151, %s152
      %p164 = scmp.eq.s32.totalorder %s37, 1
      %p165 = por %p163, %p164
      %p167 = scmp.ne.s32.totalorder %s152, %s166
      %p168 = scmp.eq.s32.totalorder %s37, 0
      %p169 = por %p167, %p168
      %s171 = sadd.s32 %s170, 1
      %p174 = scmp.eq.s32.totalorder %s31, 1
      %p175 = scmp.ne.s32.totalorder %s170, %s172
      %p176 = scmp.eq.s32.totalorder %s31, 0
      %p177 = por %p175, %p176
      %p178 = scmp.ne.s32.totalorder %s170, %s172
      %p179 = scmp.eq.s32.totalorder %s36, 1
      %p180 = por %p178, %p179
      %p181 = scmp.ne.s32.totalorder %s172, %s173
      %p182 = scmp.eq.s32.totalorder %s36, 0
      %p183 = por %p181, %p182
      %p184 = scmp.ne.s32.totalorder %s172, %s173
      %p185 = scmp.eq.s32.totalorder %s37, 1
      %p186 = por %p184, %p185
      %p188 = scmp.ne.s32.totalorder %s173, %s187
      %p189 = scmp.eq.s32.totalorder %s37, 0
      %p190 = por %p188, %p189
      %s192 = sadd.s32 %s191, 1
      %p195 = scmp.eq.s32.totalorder %s31, 1
      %p196 = scmp.ne.s32.totalorder %s191, %s193
      %p197 = scmp.eq.s32.totalorder %s31, 0
      %p198 = por %p196, %p197
      %p199 = scmp.ne.s32.totalorder %s191, %s193
      %p200 = scmp.eq.s32.totalorder %s36, 1
      %p201 = por %p199, %p200
      %p202 = scmp.ne.s32.totalorder %s193, %s194
      %p203 = scmp.eq.s32.totalorder %s36, 0
      %p204 = por %p202, %p203
      %p205 = scmp.ne.s32.totalorder %s193, %s194
      %p206 = scmp.eq.s32.totalorder %s37, 1
      %p207 = por %p205, %p206
      %p209 = scmp.ne.s32.totalorder %s194, %s208
      %p210 = scmp.eq.s32.totalorder %s37, 0
      %p211 = por %p209, %p210
      %s213 = sadd.s32 %s212, 1
      %p216 = scmp.eq.s32.totalorder %s31, 1
      %p217 = scmp.ne.s32.totalorder %s212, %s214
      %p218 = scmp.eq.s32.totalorder %s31, 0
      %p219 = por %p217, %p218
      %p220 = scmp.ne.s32.totalorder %s212, %s214
      %p221 = scmp.eq.s32.totalorder %s36, 1
      %p222 = por %p220, %p221
      %p223 = scmp.ne.s32.totalorder %s214, %s215
      %p224 = scmp.eq.s32.totalorder %s36, 0
      %p225 = por %p223, %p224
      %p226 = scmp.ne.s32.totalorder %s214, %s215
      %p227 = scmp.eq.s32.totalorder %s37, 1
      %p228 = por %p226, %p227
      %p230 = scmp.ne.s32.totalorder %s215, %s229
      %p231 = scmp.eq.s32.totalorder %s37, 0
      %p232 = por %p230, %p231
      %s234 = sadd.s32 %s233, 1
      %p237 = scmp.eq.s32.totalorder %s31, 1
      %p238 = scmp.ne.s32.totalorder %s233, %s235
      %p239 = scmp.eq.s32.totalorder %s31, 0
      %p240 = por %p238, %p239
      %p241 = scmp.ne.s32.totalorder %s233, %s235
      %p242 = scmp.eq.s32.totalorder %s36, 1
      %p243 = por %p241, %p242
      %p244 = scmp.ne.s32.totalorder %s235, %s236
      %p245 = scmp.eq.s32.totalorder %s36, 0
      %p246 = por %p244, %p245
      %p247 = scmp.ne.s32.totalorder %s235, %s236
      %p248 = scmp.eq.s32.totalorder %s37, 1
      %p249 = por %p247, %p248
      %p251 = scmp.ne.s32.totalorder %s236, %s250
      %p252 = scmp.eq.s32.totalorder %s37, 0
      %p253 = por %p251, %p252
      %s255 = sadd.s32 %s254, 1
      %p258 = scmp.eq.s32.totalorder %s31, 1
      %p259 = scmp.ne.s32.totalorder %s254, %s256
      %p260 = scmp.eq.s32.totalorder %s31, 0
      %p261 = por %p259, %p260
      %p262 = scmp.ne.s32.totalorder %s254, %s256
      %p263 = scmp.eq.s32.totalorder %s36, 1
      %p264 = por %p262, %p263
      %p265 = scmp.ne.s32.totalorder %s256, %s257
      %p266 = scmp.eq.s32.totalorder %s36, 0
      %p267 = por %p265, %p266
      %p268 = scmp.ne.s32.totalorder %s256, %s257
      %p269 = scmp.eq.s32.totalorder %s37, 1
      %p270 = por %p268, %p269
      %p272 = scmp.ne.s32.totalorder %s257, %s271
      %p273 = scmp.eq.s32.totalorder %s37, 0
      %p274 = por %p272, %p273
      %s276 = sadd.s32 %s275, 1
      %p279 = scmp.eq.s32.totalorder %s31, 1
      %p280 = scmp.ne.s32.totalorder %s275, %s277
      %p281 = scmp.eq.s32.totalorder %s31, 0
      %p282 = por %p280, %p281
      %p283 = scmp.ne.s32.totalorder %s275, %s277
      %p284 = scmp.eq.s32.totalorder %s36, 1
      %p285 = por %p283, %p284
      %p286 = scmp.ne.s32.totalorder %s277, %s278
      %p287 = scmp.eq.s32.totalorder %s36, 0
      %p288 = por %p286, %p287
      %p289 = scmp.ne.s32.totalorder %s277, %s278
      %p290 = scmp.eq.s32.totalorder %s37, 1
      %p291 = por %p289, %p290
      %p293 = scmp.ne.s32.totalorder %s278, %s292
      %p294 = scmp.eq.s32.totalorder %s37, 0
      %p295 = por %p293, %p294
      %s297 = sadd.s32 %s296, 1
      %p300 = scmp.eq.s32.totalorder %s31, 1
      %p301 = scmp.ne.s32.totalorder %s296, %s298
      %p302 = scmp.eq.s32.totalorder %s31, 0
      %p303 = por %p301, %p302
      %p304 = scmp.ne.s32.totalorder %s296, %s298
      %p305 = scmp.eq.s32.totalorder %s36, 1
      %p306 = por %p304, %p305
      %p307 = scmp.ne.s32.totalorder %s298, %s299
      %p308 = scmp.eq.s32.totalorder %s36, 0
      %p309 = por %p307, %p308
      %p310 = scmp.ne.s32.totalorder %s298, %s299
      %p311 = scmp.eq.s32.totalorder %s37, 1
      %p312 = por %p310, %p311
      %p314 = scmp.ne.s32.totalorder %s299, %s313
      %p315 = scmp.eq.s32.totalorder %s37, 0
      %p316 = por %p314, %p315
      %s317 = ssub.s32 %s31, %s38
      %p318 = scmp.eq.s32.totalorder %s317, 0
      %s320 = sadd.s32 %s319, 1
      %s321 = scalar_select %p318, %s319, %s320
      %p324 = pneg %p318
      %p325 = scmp.eq.s32.totalorder %s31, 1
      %p326 = por %p324, %p325
      %p327 = scmp.ne.s32.totalorder %s319, %s322
      %p328 = scmp.eq.s32.totalorder %s31, 0
      %p329 = por %p327, %p328
      %p330 = scmp.ne.s32.totalorder %s319, %s322
      %p331 = scmp.eq.s32.totalorder %s36, 1
      %p332 = por %p330, %p331
      %p333 = scmp.ne.s32.totalorder %s322, %s323
      %p334 = scmp.eq.s32.totalorder %s36, 0
      %p335 = por %p333, %p334
      %p336 = scmp.ne.s32.totalorder %s322, %s323
      %p337 = scmp.eq.s32.totalorder %s37, 1
      %p338 = por %p336, %p337
      %p340 = scmp.ne.s32.totalorder %s323, %s339
      %p341 = scmp.eq.s32.totalorder %s37, 0
      %p342 = por %p340, %p341
      %p343 = scmp.le.s32.totalorder 1, %s31
      %p344 = scmp.lt.s32.totalorder %s31, 3
      %p345 = pnand %p343, %p344
      %p346 = pneg %p345
      // Predicated region
      $region9: #{tpu_custom_call.1} parent=5 // pred_check
        _
      $region10: #{tpu_custom_call.1} parent=5 // pred_check_branch
        %348 = sbr.rel (%p345) target = $region12
      $region11: #{tpu_custom_call.1} parent=5 // pred_region
        %s349 = ssub.s32 %s31, 1
        // Predicated region
        $region13: #{tpu_custom_call.1} parent=11 // pred_check
          %p350 = pneg %p78
        $region14: #{tpu_custom_call.1} parent=11 // pred_check_branch
          %352 = sbr.rel (%p350) target = $region16
        $region15: #{tpu_custom_call.1} parent=11 // pred_region
          %s354 = ssub.s32 512, 512
          %355 = vsyncadd [#allocation6], %s354
          %s356 = sshll.u32 [#allocation5], 4
          %s357 = int_to_ptr.vmem [resolvable:$true] %s356
          %362 = dma.hbm_to_vmem [thread:$0]  %s1, 512, %s357, [#allocation6], 128, 128, 8
        $region16: #{tpu_custom_call.1} parent=11 // pred_fallthru
          _
        // Predicated region
        $region17: #{tpu_custom_call.1} parent=11 // pred_check
          %p363 = pneg %p99
        $region18: #{tpu_custom_call.1} parent=11 // pred_check_branch
          %365 = sbr.rel (%p363) target = $region20
        $region19: #{tpu_custom_call.1} parent=11 // pred_region
          %s367 = ssub.s32 16, 16
          %368 = vsyncadd [#allocation6], %s367
          %s370 = sshll.u32 [#allocation7], 4
          %s371 = int_to_ptr.vmem [resolvable:$true] %s370
          %373 = dma.hbm_to_vmem [thread:$0]  %s2, 16, %s371, [#allocation6]
        $region20: #{tpu_custom_call.1} parent=11 // pred_fallthru
          _
        // Predicated region
        $region21: #{tpu_custom_call.1} parent=11 // pred_check
          %p374 = pneg %p120
        $region22: #{tpu_custom_call.1} parent=11 // pred_check_branch
          %376 = sbr.rel (%p374) target = $region24
        $region23: #{tpu_custom_call.1} parent=11 // pred_region
          %s378 = ssub.s32 512, 512
          %379 = vsyncadd [#allocation9], %s378
          %s380 = sshll.u32 [#allocation8], 4
          %s381 = int_to_ptr.vmem [resolvable:$true] %s380
          %386 = dma.hbm_to_vmem [thread:$0]  %s3, 512, %s381, [#allocation9], 128, 128, 8
        $region24: #{tpu_custom_call.1} parent=11 // pred_fallthru
          _
        // Predicated region
        $region25: #{tpu_custom_call.1} parent=11 // pred_check
          %p387 = pneg %p141
        $region26: #{tpu_custom_call.1} parent=11 // pred_check_branch
          %389 = sbr.rel (%p387) target = $region28
        $region27: #{tpu_custom_call.1} parent=11 // pred_region
          %s391 = ssub.s32 16, 16
          %392 = vsyncadd [#allocation9], %s391
          %s394 = sshll.u32 [#allocation10], 4
          %s395 = int_to_ptr.vmem [resolvable:$true] %s394
          %397 = dma.hbm_to_vmem [thread:$0]  %s4, 16, %s395, [#allocation9]
        $region28: #{tpu_custom_call.1} parent=11 // pred_fallthru
          _
        // Predicated region
        $region29: #{tpu_custom_call.1} parent=11 // pred_check
          %p398 = pneg %p162
        $region30: #{tpu_custom_call.1} parent=11 // pred_check_branch
          %400 = sbr.rel (%p398) target = $region32
        $region31: #{tpu_custom_call.1} parent=11 // pred_region
          %s402 = ssub.s32 512, 512
          %403 = vsyncadd [#allocation12], %s402
          %s404 = sshll.u32 [#allocation11], 4
          %s405 = int_to_ptr.vmem [resolvable:$true] %s404
          %410 = dma.hbm_to_vmem [thread:$0]  %s5, 512, %s405, [#allocation12], 128, 128, 8
        $region32: #{tpu_custom_call.1} parent=11 // pred_fallthru
          _
        // Predicated region
        $region33: #{tpu_custom_call.1} parent=11 // pred_check
          %p411 = pneg %p183
        $region34: #{tpu_custom_call.1} parent=11 // pred_check_branch
          %413 = sbr.rel (%p411) target = $region36
        $region35: #{tpu_custom_call.1} parent=11 // pred_region
          %s415 = ssub.s32 16, 16
          %416 = vsyncadd [#allocation12], %s415
          %s418 = sshll.u32 [#allocation13], 4
          %s419 = int_to_ptr.vmem [resolvable:$true] %s418
          %421 = dma.hbm_to_vmem [thread:$0]  %s6, 16, %s419, [#allocation12]
        $region36: #{tpu_custom_call.1} parent=11 // pred_fallthru
          _
        // Predicated region
        $region37: #{tpu_custom_call.1} parent=11 // pred_check
          %p422 = pneg %p204
        $region38: #{tpu_custom_call.1} parent=11 // pred_check_branch
          %424 = sbr.rel (%p422) target = $region40
        $region39: #{tpu_custom_call.1} parent=11 // pred_region
          %s426 = ssub.s32 1024, 1024
          %427 = vsyncadd [#allocation15], %s426
          %s428 = sshll.u32 [#allocation14], 4
          %s429 = int_to_ptr.vmem [resolvable:$true] %s428
          %434 = dma.hbm_to_vmem [thread:$0]  %s7, 1024, %s429, [#allocation15], 128, 128, 8
        $region40: #{tpu_custom_call.1} parent=11 // pred_fallthru
          _
        // Predicated region
        $region41: #{tpu_custom_call.1} parent=11 // pred_check
          %p435 = pneg %p225
        $region42: #{tpu_custom_call.1} parent=11 // pred_check_branch
          %437 = sbr.rel (%p435) target = $region44
        $region43: #{tpu_custom_call.1} parent=11 // pred_region
          %s439 = ssub.s32 16, 16
          %440 = vsyncadd [#allocation15], %s439
          %s442 = sshll.u32 [#allocation16], 4
          %s443 = int_to_ptr.vmem [resolvable:$true] %s442
          %445 = dma.hbm_to_vmem [thread:$0]  %s8, 16, %s443, [#allocation15]
        $region44: #{tpu_custom_call.1} parent=11 // pred_fallthru
          _
        // Predicated region
        $region45: #{tpu_custom_call.1} parent=11 // pred_check
          %p446 = pneg %p246
        $region46: #{tpu_custom_call.1} parent=11 // pred_check_branch
          %448 = sbr.rel (%p446) target = $region48
        $region47: #{tpu_custom_call.1} parent=11 // pred_region
          %s450 = ssub.s32 16, 16
          %451 = vsyncadd [#allocation18], %s450
          %s453 = sshll.u32 [#allocation17], 4
          %s454 = int_to_ptr.vmem [resolvable:$true] %s453
          %456 = dma.hbm_to_vmem [thread:$0]  %s9, 16, %s454, [#allocation18]
        $region48: #{tpu_custom_call.1} parent=11 // pred_fallthru
          _
        // Predicated region
        $region49: #{tpu_custom_call.1} parent=11 // pred_check
          %p457 = pneg %p267
        $region50: #{tpu_custom_call.1} parent=11 // pred_check_branch
          %459 = sbr.rel (%p457) target = $region52
        $region51: #{tpu_custom_call.1} parent=11 // pred_region
          %s461 = ssub.s32 16, 16
          %462 = vsyncadd [#allocation18], %s461
          %s464 = sshll.u32 [#allocation19], 4
          %s465 = int_to_ptr.vmem [resolvable:$true] %s464
          %467 = dma.hbm_to_vmem [thread:$0]  %s10, 16, %s465, [#allocation18]
        $region52: #{tpu_custom_call.1} parent=11 // pred_fallthru
          _
        // Predicated region
        $region53: #{tpu_custom_call.1} parent=11 // pred_check
          %p468 = pneg %p288
        $region54: #{tpu_custom_call.1} parent=11 // pred_check_branch
          %470 = sbr.rel (%p468) target = $region56
        $region55: #{tpu_custom_call.1} parent=11 // pred_region
          %s472 = ssub.s32 16, 16
          %473 = vsyncadd [#allocation21], %s472
          %s475 = sshll.u32 [#allocation20], 4
          %s476 = int_to_ptr.vmem [resolvable:$true] %s475
          %478 = dma.hbm_to_vmem [thread:$0]  %s11, 16, %s476, [#allocation21]
        $region56: #{tpu_custom_call.1} parent=11 // pred_fallthru
          _
        // Predicated region
        $region57: #{tpu_custom_call.1} parent=11 // pred_check
          %p479 = pneg %p309
        $region58: #{tpu_custom_call.1} parent=11 // pred_check_branch
          %481 = sbr.rel (%p479) target = $region60
        $region59: #{tpu_custom_call.1} parent=11 // pred_region
          %s483 = ssub.s32 16, 16
          %484 = vsyncadd [#allocation21], %s483
          %s486 = sshll.u32 [#allocation22], 4
          %s487 = int_to_ptr.vmem [resolvable:$true] %s486
          %489 = dma.hbm_to_vmem [thread:$0]  %s12, 16, %s487, [#allocation21]
        $region60: #{tpu_custom_call.1} parent=11 // pred_fallthru
          _
      $region12: #{tpu_custom_call.1} parent=5 // pred_fallthru
        _
      %p490 = scmp.lt.s32.totalorder %s31, 2
      // Predicated region
      $region61: #{tpu_custom_call.1} parent=5 // pred_check
        %p491 = pneg %p490
      $region62: #{tpu_custom_call.1} parent=5 // pred_check_branch
        %493 = sbr.rel (%p491) target = $region64
      $region63: #{tpu_custom_call.1} parent=5 // pred_region
        // Predicated region
        $region65: #{tpu_custom_call.1} parent=63 // pred_check
          %p494 = pneg %p51
        $region66: #{tpu_custom_call.1} parent=63 // pred_check_branch
          %496 = sbr.rel (%p494) target = $region68
        $region67: #{tpu_custom_call.1} parent=63 // pred_region
          %s497 = sand.u32 %s41, 1
          %s498 = scalar_lea.sflag [#allocation3], %s497
          %s499 = sand.u32 %s41, 1
          %s500 = smul.addr %s499, 8
          %s501 = scalar_lea.vmem [#allocation2], %s500
          %s503 = ssub.s32 128, 128
          %504 = vsyncadd %s498, %s503
          %s505 = smul.addr %s31, 128
          %s506 = scalar_lea.hbm %s0, %s505
          %s508 = sshll.u32 %s501, 4
          %s509 = int_to_ptr.vmem [resolvable:$true] %s508
          %511 = dma.hbm_to_vmem [thread:$0]  %s506, 128, %s509, %s498
        $region68: #{tpu_custom_call.1} parent=63 // pred_fallthru
          _
      $region64: #{tpu_custom_call.1} parent=5 // pred_fallthru
        _
      %p512 = scmp.le.s32.totalorder 1, %s31
      %p513 = scmp.lt.s32.totalorder %s31, 3
      %p514 = pnand %p512, %p513
      %p515 = pneg %p514
      // Predicated region
      $region69: #{tpu_custom_call.1} parent=5 // pred_check
        _
      $region70: #{tpu_custom_call.1} parent=5 // pred_check_branch
        %517 = sbr.rel (%p514) target = $region72
      $region71: #{tpu_custom_call.1} parent=5 // pred_region
        %s518 = ssub.s32 %s31, 1
        %s519 = sand.u32 %s44, 1
        %s520 = scalar_lea.sflag [#allocation3], %s519
        %s521 = sand.u32 %s44, 1
        %s522 = smul.addr %s521, 8
        %s523 = scalar_lea.vmem [#allocation2], %s522
        // Predicated region
        $region73: #{tpu_custom_call.1} parent=71 // pred_check
          %p524 = pneg %p57
        $region74: #{tpu_custom_call.1} parent=71 // pred_check_branch
          %526 = sbr.rel (%p524) target = $region76
        $region75: #{tpu_custom_call.1} parent=71 // pred_region
          %527 = dma.done %s520, 128
        $region76: #{tpu_custom_call.1} parent=71 // pred_fallthru
          _
        // Predicated region
        $region77: #{tpu_custom_call.1} parent=71 // pred_check
          %p528 = pneg %p78
        $region78: #{tpu_custom_call.1} parent=71 // pred_check_branch
          %530 = sbr.rel (%p528) target = $region80
        $region79: #{tpu_custom_call.1} parent=71 // pred_region
          %531 = dma.done [#allocation6], 512
        $region80: #{tpu_custom_call.1} parent=71 // pred_fallthru
          _
        // Predicated region
        $region81: #{tpu_custom_call.1} parent=71 // pred_check
          %p532 = pneg %p99
        $region82: #{tpu_custom_call.1} parent=71 // pred_check_branch
          %534 = sbr.rel (%p532) target = $region84
        $region83: #{tpu_custom_call.1} parent=71 // pred_region
          %535 = dma.done [#allocation6], 16
        $region84: #{tpu_custom_call.1} parent=71 // pred_fallthru
          _
        // Predicated region
        $region85: #{tpu_custom_call.1} parent=71 // pred_check
          %p536 = pneg %p120
        $region86: #{tpu_custom_call.1} parent=71 // pred_check_branch
          %538 = sbr.rel (%p536) target = $region88
        $region87: #{tpu_custom_call.1} parent=71 // pred_region
          %539 = dma.done [#allocation9], 512
        $region88: #{tpu_custom_call.1} parent=71 // pred_fallthru
          _
        // Predicated region
        $region89: #{tpu_custom_call.1} parent=71 // pred_check
          %p540 = pneg %p141
        $region90: #{tpu_custom_call.1} parent=71 // pred_check_branch
          %542 = sbr.rel (%p540) target = $region92
        $region91: #{tpu_custom_call.1} parent=71 // pred_region
          %543 = dma.done [#allocation9], 16
        $region92: #{tpu_custom_call.1} parent=71 // pred_fallthru
          _
        // Predicated region
        $region93: #{tpu_custom_call.1} parent=71 // pred_check
          %p544 = pneg %p162
        $region94: #{tpu_custom_call.1} parent=71 // pred_check_branch
          %546 = sbr.rel (%p544) target = $region96
        $region95: #{tpu_custom_call.1} parent=71 // pred_region
          %547 = dma.done [#allocation12], 512
        $region96: #{tpu_custom_call.1} parent=71 // pred_fallthru
          _
        // Predicated region
        $region97: #{tpu_custom_call.1} parent=71 // pred_check
          %p548 = pneg %p183
        $region98: #{tpu_custom_call.1} parent=71 // pred_check_branch
          %550 = sbr.rel (%p548) target = $region100
        $region99: #{tpu_custom_call.1} parent=71 // pred_region
          %551 = dma.done [#allocation12], 16
        $region100: #{tpu_custom_call.1} parent=71 // pred_fallthru
          _
        // Predicated region
        $region101: #{tpu_custom_call.1} parent=71 // pred_check
          %p552 = pneg %p204
        $region102: #{tpu_custom_call.1} parent=71 // pred_check_branch
          %554 = sbr.rel (%p552) target = $region104
        $region103: #{tpu_custom_call.1} parent=71 // pred_region
          %555 = dma.done [#allocation15], 1024
        $region104: #{tpu_custom_call.1} parent=71 // pred_fallthru
          _
        // Predicated region
        $region105: #{tpu_custom_call.1} parent=71 // pred_check
          %p556 = pneg %p225
        $region106: #{tpu_custom_call.1} parent=71 // pred_check_branch
          %558 = sbr.rel (%p556) target = $region108
        $region107: #{tpu_custom_call.1} parent=71 // pred_region
          %559 = dma.done [#allocation15], 16
        $region108: #{tpu_custom_call.1} parent=71 // pred_fallthru
          _
        // Predicated region
        $region109: #{tpu_custom_call.1} parent=71 // pred_check
          %p560 = pneg %p246
        $region110: #{tpu_custom_call.1} parent=71 // pred_check_branch
          %562 = sbr.rel (%p560) target = $region112
        $region111: #{tpu_custom_call.1} parent=71 // pred_region
          %563 = dma.done [#allocation18], 16
        $region112: #{tpu_custom_call.1} parent=71 // pred_fallthru
          _
        // Predicated region
        $region113: #{tpu_custom_call.1} parent=71 // pred_check
          %p564 = pneg %p267
        $region114: #{tpu_custom_call.1} parent=71 // pred_check_branch
          %566 = sbr.rel (%p564) target = $region116
        $region115: #{tpu_custom_call.1} parent=71 // pred_region
          %567 = dma.done [#allocation18], 16
        $region116: #{tpu_custom_call.1} parent=71 // pred_fallthru
          _
        // Predicated region
        $region117: #{tpu_custom_call.1} parent=71 // pred_check
          %p568 = pneg %p288
        $region118: #{tpu_custom_call.1} parent=71 // pred_check_branch
          %570 = sbr.rel (%p568) target = $region120
        $region119: #{tpu_custom_call.1} parent=71 // pred_region
          %571 = dma.done [#allocation21], 16
        $region120: #{tpu_custom_call.1} parent=71 // pred_fallthru
          _
        // Predicated region
        $region121: #{tpu_custom_call.1} parent=71 // pred_check
          %p572 = pneg %p309
        $region122: #{tpu_custom_call.1} parent=71 // pred_check_branch
          %574 = sbr.rel (%p572) target = $region124
        $region123: #{tpu_custom_call.1} parent=71 // pred_region
          %575 = dma.done [#allocation21], 16
        $region124: #{tpu_custom_call.1} parent=71 // pred_fallthru
          _
        %s576 = sand.u32 %s44, 1
        %s577 = scalar_lea.sflag [#allocation3], %s576
        %s578 = sand.u32 %s44, 1
        %s579 = smul.addr %s578, 8
        %s580 = scalar_lea.vmem [#allocation2], %s579
        %p581 = pneg %p57
        %p582 = pneg %p54
        %p583 = pneg %p78
        %p584 = pneg %p75
        %p585 = pneg %p99
        %p586 = pneg %p96
        %p587 = pneg %p120
        %p588 = pneg %p117
        %p589 = pneg %p141
        %p590 = pneg %p138
        %p591 = pneg %p162
        %p592 = pneg %p159
        %p593 = pneg %p183
        %p594 = pneg %p180
        %p595 = pneg %p204
        %p596 = pneg %p201
        %p597 = pneg %p225
        %p598 = pneg %p222
        %p599 = pneg %p246
        %p600 = pneg %p243
        %p601 = pneg %p267
        %p602 = pneg %p264
        %p603 = pneg %p288
        %p604 = pneg %p285
        %p605 = pneg %p309
        %p606 = pneg %p306
        %p607 = pneg %p335
        %p608 = pneg %p332
        %s609 = sand.u32 %s322, 1
        %s610 = scalar_lea.sflag [#allocation4], %s609
        %s611 = sand.u32 %s322, 1
        %s612 = smul.addr %s611, 8
        %s613 = scalar_lea.vmem [#allocation23], %s612
        %v614 = vld [vmem:[%s523] sm:$0xff]
        %v615 = vld [vmem:[#allocation5] sm:$0xff]
        %v616 = vld [vmem:[#allocation5 + $0x8] sm:$0xff]
        %v617 = vld [vmem:[#allocation5 + $0x10] sm:$0xff]
        %v618 = vld [vmem:[#allocation5 + $0x18] sm:$0xff]
        %v619 = vld [vmem:[#allocation7] sm:$0x1]
        %v621 = vlaneseq
        %v622 = vshrl.u32 %v621, 7
        %v623 = vsub.s32 0, %v622
        %v624 = vrot.slane %v619, %v623
        %vm626 = vcmask 261120
        %v628 = vsel %vm626, %v614, 0
        %630 = vmatprep.subr.mxu0 0.0
        %631 = vmatpush1.msra.mxu0 %v615
        %632 = vmatprep.subr.mxu0 0.0
        %633 = vmatpush1.msra.mxu0 %v616
        %634 = vmatprep.subr.mxu0 0.0
        %635 = vmatpush1.msra.mxu0 %v617
        %636 = vmatprep.subr.mxu0 0.0
        %637 = vmatpush1.msra.mxu0 %v618
        %638 = vmatprep.subr.mxu0 0.0
        %639 = vmatpush1.msra.mxu0 0.0
        %640 = vmatprep.subr.mxu0 0.0
        %641 = vmatpush1.msra.mxu0 0.0
        %642 = vmatprep.subr.mxu0 0.0
        %643 = vmatpush1.msra.mxu0 0.0
        %644 = vmatprep.subr.mxu0 0.0
        %645 = vmatpush1.msra.mxu0 0.0
        %646 = vmatprep.subr.mxu0 0.0
        %647 = vmatpush1.msra.mxu0 0.0
        %648 = vmatprep.subr.mxu0 0.0
        %649 = vmatpush1.msra.mxu0 0.0
        %650 = vmatprep.subr.mxu0 0.0
        %651 = vmatpush1.msra.mxu0 0.0
        %652 = vmatprep.subr.mxu0 0.0
        %653 = vmatpush1.msra.mxu0 0.0
        %654 = vmatprep.subr.mxu0 0.0
        %655 = vmatpush1.msra.mxu0 0.0
        %656 = vmatprep.subr.mxu0 0.0
        %657 = vmatpush1.msra.mxu0 0.0
        %658 = vmatprep.subr.mxu0 0.0
        %659 = vmatpush1.msra.mxu0 0.0
        %660 = vmatprep.subr.mxu0 0.0
        %661 = vmatpush1.msra.mxu0 0.0
        %662 = vmatprep.subr.mxu0 0.0
        %663 = vmatpush1.msra.mxu0 0.0
        %664 = vmatprep.subr.mxu0 0.0
        %665 = vmatpush1.msra.mxu0 0.0
        %666 = vmatprep.subr.mxu0 0.0
        %667 = vmatpush1.msra.mxu0 0.0
        %668 = vmatprep.subr.mxu0 0.0
        %669 = vmatpush1.msra.mxu0 0.0
        %670 = vmatprep.subr.mxu0 0.0
        %671 = vmatpush1.msra.mxu0 0.0
        %672 = vmatprep.subr.mxu0 0.0
        %673 = vmatpush1.msra.mxu0 0.0
        %674 = vmatprep.subr.mxu0 0.0
        %675 = vmatpush1.msra.mxu0 0.0
        %676 = vmatprep.subr.mxu0 0.0
        %677 = vmatpush1.msra.mxu0 0.0
        %678 = vmatprep.subr.mxu0 0.0
        %679 = vmatpush1.msra.mxu0 0.0
        %680 = vmatprep.subr.mxu0 0.0
        %681 = vmatpush1.msra.mxu0 0.0
        %682 = vmatprep.subr.mxu0 0.0
        %683 = vmatpush1.msra.mxu0 0.0
        %684 = vmatprep.subr.mxu0 0.0
        %685 = vmatpush1.msra.mxu0 0.0
        %686 = vmatprep.subr.mxu0 0.0
        %687 = vmatpush1.msra.mxu0 0.0
        %688 = vmatprep.subr.mxu0 0.0
        %689 = vmatpush1.msra.mxu0 0.0
        %690 = vmatprep.subr.mxu0 0.0
        %691 = vmatpush1.msra.mxu0 0.0
        %692 = vmatprep.subr.mxu0 0.0
        %693 = vmatpush1.msra.mxu0 0.0
        %694 = vmatprep.mubr.f32.mxu0 0.0
        %695 = vmatmul.mubr.f32.gmra.mrb[0].mxu0 %v628
        %v696 = vpop.f32.mrb[0].mxu0
        %v697 = vadd.f32 %v624, %v696
        %v698 = vpop.f32.mrb[0].mxu0
        %699 = vdwg.mxu0
        %701 = vrot.lane.b32.xlu0 %v697, 96
        %v702 = vpop.permute.xlu0 %701
        %vm703 = vcmask 64512
        %v704 = vsel %vm703, %v697, 0
        %v706 = vsel %vm703, %v702, 0
        %708 = vmatprep.subr.mxu0 0.0
        %709 = vmatpush1.xpose.msra.mxu0 %v706
        %710 = vmatprep.subr.mxu0 0.0
        %711 = vmatpush1.xpose.msra.mxu0 0.0
        %712 = vmatprep.subr.mxu0 0.0
        %713 = vmatpush1.xpose.msra.mxu0 0.0
        %714 = vmatprep.subr.mxu0 0.0
        %715 = vmatpush1.xpose.msra.mxu0 0.0
        %716 = vmatprep.subr.mxu0 0.0
        %717 = vmatpush1.xpose.msra.mxu0 0.0
        %718 = vmatprep.subr.mxu0 0.0
        %719 = vmatpush1.xpose.msra.mxu0 0.0
        %720 = vmatprep.subr.mxu0 0.0
        %721 = vmatpush1.xpose.msra.mxu0 0.0
        %722 = vmatprep.subr.mxu0 0.0
        %723 = vmatpush1.xpose.msra.mxu0 0.0
        %724 = vmatprep.subr.mxu0 0.0
        %725 = vmatpush1.xpose.msra.mxu0 0.0
        %726 = vmatprep.subr.mxu0 0.0
        %727 = vmatpush1.xpose.msra.mxu0 0.0
        %728 = vmatprep.subr.mxu0 0.0
        %729 = vmatpush1.xpose.msra.mxu0 0.0
        %730 = vmatprep.subr.mxu0 0.0
        %731 = vmatpush1.xpose.msra.mxu0 0.0
        %732 = vmatprep.subr.mxu0 0.0
        %733 = vmatpush1.xpose.msra.mxu0 0.0
        %734 = vmatprep.subr.mxu0 0.0
        %735 = vmatpush1.xpose.msra.mxu0 0.0
        %736 = vmatprep.subr.mxu0 0.0
        %737 = vmatpush1.xpose.msra.mxu0 0.0
        %738 = vmatprep.subr.mxu0 0.0
        %739 = vmatpush1.xpose.msra.mxu0 0.0
        %740 = vmatprep.subr.mxu0 0.0
        %741 = vmatpush1.xpose.msra.mxu0 0.0
        %742 = vmatprep.subr.mxu0 0.0
        %743 = vmatpush1.xpose.msra.mxu0 0.0
        %744 = vmatprep.subr.mxu0 0.0
        %745 = vmatpush1.xpose.msra.mxu0 0.0
        %746 = vmatprep.subr.mxu0 0.0
        %747 = vmatpush1.xpose.msra.mxu0 0.0
        %748 = vmatprep.subr.mxu0 0.0
        %749 = vmatpush1.xpose.msra.mxu0 0.0
        %750 = vmatprep.subr.mxu0 0.0
        %751 = vmatpush1.xpose.msra.mxu0 0.0
        %752 = vmatprep.subr.mxu0 0.0
        %753 = vmatpush1.xpose.msra.mxu0 0.0
        %754 = vmatprep.subr.mxu0 0.0
        %755 = vmatpush1.xpose.msra.mxu0 0.0
        %756 = vmatprep.subr.mxu0 0.0
        %757 = vmatpush1.xpose.msra.mxu0 0.0
        %758 = vmatprep.subr.mxu0 0.0
        %759 = vmatpush1.xpose.msra.mxu0 0.0
        %760 = vmatprep.subr.mxu0 0.0
        %761 = vmatpush1.xpose.msra.mxu0 0.0
        %762 = vmatprep.subr.mxu0 0.0
        %763 = vmatpush1.xpose.msra.mxu0 0.0
        %764 = vmatprep.subr.mxu0 0.0
        %765 = vmatpush1.xpose.msra.mxu0 0.0
        %766 = vmatprep.subr.mxu0 0.0
        %767 = vmatpush1.xpose.msra.mxu0 0.0
        %768 = vmatprep.subr.mxu0 0.0
        %769 = vmatpush1.xpose.msra.mxu0 0.0
        %770 = vmatprep.subr.mxu0 0.0
        %771 = vmatpush1.xpose.msra.mxu0 0.0
        %772 = vmatprep.mubr.f32.mxu0 0.0
        %773 = vmatmul.mubr.f32.gmra.mrb[0].mxu0 %v704
        %v774 = vpop.f32.mrb[0].mxu0
        %v775 = vadd.f32 0.0, %v774
        %v776 = vpop.f32.mrb[0].mxu0
        %777 = vdwg.mxu0
        %v778 = vsel %vm703, %v775, -inf
        %779 = vmax.xlane.f32.xlu0 %v778
        %v780 = vpop.xlane.xlu0 %779
        %v781 = vsub.f32 %v775, %v780
        %v782 = vmul.f32 %v781, 1.442695
        %v783 = vpow.pop %v782
        %v784 = vsel %vm703, %v783, 0.0
        %785 = vadd.xlane.f32.xlu0 %v784
        %v786 = vpop.xlane.xlu0 %785
        %v787 = vrcp.pop %v786
        %v788 = vmul.f32 %v783, %v787
        %789 = vrot.lane.b32.xlu0 %v697, 64
        %v790 = vpop.permute.xlu0 %789
        %v793 = vsel %vm703, %v788, 0
        %795 = vmatprep.subr.mxu0 0.0
        %796 = vmatpush1.msra.mxu0 %v790
        %797 = vmatprep.subr.mxu0 0.0
        %798 = vmatpush1.msra.mxu0 0.0
        %799 = vmatprep.subr.mxu0 0.0
        %800 = vmatpush1.msra.mxu0 0.0
        %801 = vmatprep.subr.mxu0 0.0
        %802 = vmatpush1.msra.mxu0 0.0
        %803 = vmatprep.subr.mxu0 0.0
        %804 = vmatpush1.msra.mxu0 0.0
        %805 = vmatprep.subr.mxu0 0.0
        %806 = vmatpush1.msra.mxu0 0.0
        %807 = vmatprep.subr.mxu0 0.0
        %808 = vmatpush1.msra.mxu0 0.0
        %809 = vmatprep.subr.mxu0 0.0
        %810 = vmatpush1.msra.mxu0 0.0
        %811 = vmatprep.subr.mxu0 0.0
        %812 = vmatpush1.msra.mxu0 0.0
        %813 = vmatprep.subr.mxu0 0.0
        %814 = vmatpush1.msra.mxu0 0.0
        %815 = vmatprep.subr.mxu0 0.0
        %816 = vmatpush1.msra.mxu0 0.0
        %817 = vmatprep.subr.mxu0 0.0
        %818 = vmatpush1.msra.mxu0 0.0
        %819 = vmatprep.subr.mxu0 0.0
        %820 = vmatpush1.msra.mxu0 0.0
        %821 = vmatprep.subr.mxu0 0.0
        %822 = vmatpush1.msra.mxu0 0.0
        %823 = vmatprep.subr.mxu0 0.0
        %824 = vmatpush1.msra.mxu0 0.0
        %825 = vmatprep.subr.mxu0 0.0
        %826 = vmatpush1.msra.mxu0 0.0
        %827 = vmatprep.subr.mxu0 0.0
        %828 = vmatpush1.msra.mxu0 0.0
        %829 = vmatprep.subr.mxu0 0.0
        %830 = vmatpush1.msra.mxu0 0.0
        %831 = vmatprep.subr.mxu0 0.0
        %832 = vmatpush1.msra.mxu0 0.0
        %833 = vmatprep.subr.mxu0 0.0
        %834 = vmatpush1.msra.mxu0 0.0
        %835 = vmatprep.subr.mxu0 0.0
        %836 = vmatpush1.msra.mxu0 0.0
        %837 = vmatprep.subr.mxu0 0.0
        %838 = vmatpush1.msra.mxu0 0.0
        %839 = vmatprep.subr.mxu0 0.0
        %840 = vmatpush1.msra.mxu0 0.0
        %841 = vmatprep.subr.mxu0 0.0
        %842 = vmatpush1.msra.mxu0 0.0
        %843 = vmatprep.subr.mxu0 0.0
        %844 = vmatpush1.msra.mxu0 0.0
        %845 = vmatprep.subr.mxu0 0.0
        %846 = vmatpush1.msra.mxu0 0.0
        %847 = vmatprep.subr.mxu0 0.0
        %848 = vmatpush1.msra.mxu0 0.0
        %849 = vmatprep.subr.mxu0 0.0
        %850 = vmatpush1.msra.mxu0 0.0
        %851 = vmatprep.subr.mxu0 0.0
        %852 = vmatpush1.msra.mxu0 0.0
        %853 = vmatprep.subr.mxu0 0.0
        %854 = vmatpush1.msra.mxu0 0.0
        %855 = vmatprep.subr.mxu0 0.0
        %856 = vmatpush1.msra.mxu0 0.0
        %857 = vmatprep.subr.mxu0 0.0
        %858 = vmatpush1.msra.mxu0 0.0
        %859 = vmatprep.mubr.f32.mxu0 0.0
        %860 = vmatmul.mubr.f32.gmra.mrb[0].mxu0 %v793
        %v861 = vpop.f32.mrb[0].mxu0
        %v862 = vadd.f32 0.0, %v861
        %v863 = vpop.f32.mrb[0].mxu0
        %864 = vdwg.mxu0
        %865 = vrot.lane.b32.xlu0 %v697, 120
        %v866 = vpop.permute.xlu0 %865
        %867 = vrot.lane.b32.xlu0 %v697, 88
        %v868 = vpop.permute.xlu0 %867
        %v869 = vsel %vm703, %v866, 0
        %v871 = vsel %vm703, %v868, 0
        %873 = vmatprep.subr.mxu0 0.0
        %874 = vmatpush1.xpose.msra.mxu0 %v871
        %875 = vmatprep.subr.mxu0 0.0
        %876 = vmatpush1.xpose.msra.mxu0 0.0
        %877 = vmatprep.subr.mxu0 0.0
        %878 = vmatpush1.xpose.msra.mxu0 0.0
        %879 = vmatprep.subr.mxu0 0.0
        %880 = vmatpush1.xpose.msra.mxu0 0.0
        %881 = vmatprep.subr.mxu0 0.0
        %882 = vmatpush1.xpose.msra.mxu0 0.0
        %883 = vmatprep.subr.mxu0 0.0
        %884 = vmatpush1.xpose.msra.mxu0 0.0
        %885 = vmatprep.subr.mxu0 0.0
        %886 = vmatpush1.xpose.msra.mxu0 0.0
        %887 = vmatprep.subr.mxu0 0.0
        %888 = vmatpush1.xpose.msra.mxu0 0.0
        %889 = vmatprep.subr.mxu0 0.0
        %890 = vmatpush1.xpose.msra.mxu0 0.0
        %891 = vmatprep.subr.mxu0 0.0
        %892 = vmatpush1.xpose.msra.mxu0 0.0
        %893 = vmatprep.subr.mxu0 0.0
        %894 = vmatpush1.xpose.msra.mxu0 0.0
        %895 = vmatprep.subr.mxu0 0.0
        %896 = vmatpush1.xpose.msra.mxu0 0.0
        %897 = vmatprep.subr.mxu0 0.0
        %898 = vmatpush1.xpose.msra.mxu0 0.0
        %899 = vmatprep.subr.mxu0 0.0
        %900 = vmatpush1.xpose.msra.mxu0 0.0
        %901 = vmatprep.subr.mxu0 0.0
        %902 = vmatpush1.xpose.msra.mxu0 0.0
        %903 = vmatprep.subr.mxu0 0.0
        %904 = vmatpush1.xpose.msra.mxu0 0.0
        %905 = vmatprep.subr.mxu0 0.0
        %906 = vmatpush1.xpose.msra.mxu0 0.0
        %907 = vmatprep.subr.mxu0 0.0
        %908 = vmatpush1.xpose.msra.mxu0 0.0
        %909 = vmatprep.subr.mxu0 0.0
        %910 = vmatpush1.xpose.msra.mxu0 0.0
        %911 = vmatprep.subr.mxu0 0.0
        %912 = vmatpush1.xpose.msra.mxu0 0.0
        %913 = vmatprep.subr.mxu0 0.0
        %914 = vmatpush1.xpose.msra.mxu0 0.0
        %915 = vmatprep.subr.mxu0 0.0
        %916 = vmatpush1.xpose.msra.mxu0 0.0
        %917 = vmatprep.subr.mxu0 0.0
        %918 = vmatpush1.xpose.msra.mxu0 0.0
        %919 = vmatprep.subr.mxu0 0.0
        %920 = vmatpush1.xpose.msra.mxu0 0.0
        %921 = vmatprep.subr.mxu0 0.0
        %922 = vmatpush1.xpose.msra.mxu0 0.0
        %923 = vmatprep.subr.mxu0 0.0
        %924 = vmatpush1.xpose.msra.mxu0 0.0
        %925 = vmatprep.subr.mxu0 0.0
        %926 = vmatpush1.xpose.msra.mxu0 0.0
        %927 = vmatprep.subr.mxu0 0.0
        %928 = vmatpush1.xpose.msra.mxu0 0.0
        %929 = vmatprep.subr.mxu0 0.0
        %930 = vmatpush1.xpose.msra.mxu0 0.0
        %931 = vmatprep.subr.mxu0 0.0
        %932 = vmatpush1.xpose.msra.mxu0 0.0
        %933 = vmatprep.subr.mxu0 0.0
        %934 = vmatpush1.xpose.msra.mxu0 0.0
        %935 = vmatprep.subr.mxu0 0.0
        %936 = vmatpush1.xpose.msra.mxu0 0.0
        %937 = vmatprep.mubr.f32.mxu0 0.0
        %938 = vmatmul.mubr.f32.gmra.mrb[0].mxu0 %v869
        %v939 = vpop.f32.mrb[0].mxu0
        %v940 = vadd.f32 0.0, %v939
        %v941 = vpop.f32.mrb[0].mxu0
        %942 = vdwg.mxu0
        %v943 = vsel %vm703, %v940, -inf
        %944 = vmax.xlane.f32.xlu0 %v943
        %v945 = vpop.xlane.xlu0 %944
        %v946 = vsub.f32 %v940, %v945
        %v947 = vmul.f32 %v946, 1.442695
        %v948 = vpow.pop %v947
        %v949 = vsel %vm703, %v948, 0.0
        %950 = vadd.xlane.f32.xlu0 %v949
        %v951 = vpop.xlane.xlu0 %950
        %v952 = vrcp.pop %v951
        %v953 = vmul.f32 %v948, %v952
        %954 = vrot.lane.b32.xlu0 %v697, 56
        %v955 = vpop.permute.xlu0 %954
        %v958 = vsel %vm703, %v953, 0
        %960 = vmatprep.subr.mxu0 0.0
        %961 = vmatpush1.msra.mxu0 %v955
        %962 = vmatprep.subr.mxu0 0.0
        %963 = vmatpush1.msra.mxu0 0.0
        %964 = vmatprep.subr.mxu0 0.0
        %965 = vmatpush1.msra.mxu0 0.0
        %966 = vmatprep.subr.mxu0 0.0
        %967 = vmatpush1.msra.mxu0 0.0
        %968 = vmatprep.subr.mxu0 0.0
        %969 = vmatpush1.msra.mxu0 0.0
        %970 = vmatprep.subr.mxu0 0.0
        %971 = vmatpush1.msra.mxu0 0.0
        %972 = vmatprep.subr.mxu0 0.0
        %973 = vmatpush1.msra.mxu0 0.0
        %974 = vmatprep.subr.mxu0 0.0
        %975 = vmatpush1.msra.mxu0 0.0
        %976 = vmatprep.subr.mxu0 0.0
        %977 = vmatpush1.msra.mxu0 0.0
        %978 = vmatprep.subr.mxu0 0.0
        %979 = vmatpush1.msra.mxu0 0.0
        %980 = vmatprep.subr.mxu0 0.0
        %981 = vmatpush1.msra.mxu0 0.0
        %982 = vmatprep.subr.mxu0 0.0
        %983 = vmatpush1.msra.mxu0 0.0
        %984 = vmatprep.subr.mxu0 0.0
        %985 = vmatpush1.msra.mxu0 0.0
        %986 = vmatprep.subr.mxu0 0.0
        %987 = vmatpush1.msra.mxu0 0.0
        %988 = vmatprep.subr.mxu0 0.0
        %989 = vmatpush1.msra.mxu0 0.0
        %990 = vmatprep.subr.mxu0 0.0
        %991 = vmatpush1.msra.mxu0 0.0
        %992 = vmatprep.subr.mxu0 0.0
        %993 = vmatpush1.msra.mxu0 0.0
        %994 = vmatprep.subr.mxu0 0.0
        %995 = vmatpush1.msra.mxu0 0.0
        %996 = vmatprep.subr.mxu0 0.0
        %997 = vmatpush1.msra.mxu0 0.0
        %998 = vmatprep.subr.mxu0 0.0
        %999 = vmatpush1.msra.mxu0 0.0
        %1000 = vmatprep.subr.mxu0 0.0
        %1001 = vmatpush1.msra.mxu0 0.0
        %1002 = vmatprep.subr.mxu0 0.0
        %1003 = vmatpush1.msra.mxu0 0.0
        %1004 = vmatprep.subr.mxu0 0.0
        %1005 = vmatpush1.msra.mxu0 0.0
        %1006 = vmatprep.subr.mxu0 0.0
        %1007 = vmatpush1.msra.mxu0 0.0
        %1008 = vmatprep.subr.mxu0 0.0
        %1009 = vmatpush1.msra.mxu0 0.0
        %1010 = vmatprep.subr.mxu0 0.0
        %1011 = vmatpush1.msra.mxu0 0.0
        %1012 = vmatprep.subr.mxu0 0.0
        %1013 = vmatpush1.msra.mxu0 0.0
        %1014 = vmatprep.subr.mxu0 0.0
        %1015 = vmatpush1.msra.mxu0 0.0
        %1016 = vmatprep.subr.mxu0 0.0
        %1017 = vmatpush1.msra.mxu0 0.0
        %1018 = vmatprep.subr.mxu0 0.0
        %1019 = vmatpush1.msra.mxu0 0.0
        %1020 = vmatprep.subr.mxu0 0.0
        %1021 = vmatpush1.msra.mxu0 0.0
        %1022 = vmatprep.subr.mxu0 0.0
        %1023 = vmatpush1.msra.mxu0 0.0
        %1024 = vmatprep.mubr.f32.mxu0 0.0
        %1025 = vmatmul.mubr.f32.gmra.mrb[0].mxu0 %v958
        %v1026 = vpop.f32.mrb[0].mxu0
        %v1027 = vadd.f32 0.0, %v1026
        %v1028 = vpop.f32.mrb[0].mxu0
        %1029 = vdwg.mxu0
        %1030 = vrot.lane.b32.xlu0 %v697, 112
        %v1031 = vpop.permute.xlu0 %1030
        %1032 = vrot.lane.b32.xlu0 %v697, 80
        %v1033 = vpop.permute.xlu0 %1032
        %v1034 = vsel %vm703, %v1031, 0
        %v1036 = vsel %vm703, %v1033, 0
        %1038 = vmatprep.subr.mxu0 0.0
        %1039 = vmatpush1.xpose.msra.mxu0 %v1036
        %1040 = vmatprep.subr.mxu0 0.0
        %1041 = vmatpush1.xpose.msra.mxu0 0.0
        %1042 = vmatprep.subr.mxu0 0.0
        %1043 = vmatpush1.xpose.msra.mxu0 0.0
        %1044 = vmatprep.subr.mxu0 0.0
        %1045 = vmatpush1.xpose.msra.mxu0 0.0
        %1046 = vmatprep.subr.mxu0 0.0
        %1047 = vmatpush1.xpose.msra.mxu0 0.0
        %1048 = vmatprep.subr.mxu0 0.0
        %1049 = vmatpush1.xpose.msra.mxu0 0.0
        %1050 = vmatprep.subr.mxu0 0.0
        %1051 = vmatpush1.xpose.msra.mxu0 0.0
        %1052 = vmatprep.subr.mxu0 0.0
        %1053 = vmatpush1.xpose.msra.mxu0 0.0
        %1054 = vmatprep.subr.mxu0 0.0
        %1055 = vmatpush1.xpose.msra.mxu0 0.0
        %1056 = vmatprep.subr.mxu0 0.0
        %1057 = vmatpush1.xpose.msra.mxu0 0.0
        %1058 = vmatprep.subr.mxu0 0.0
        %1059 = vmatpush1.xpose.msra.mxu0 0.0
        %1060 = vmatprep.subr.mxu0 0.0
        %1061 = vmatpush1.xpose.msra.mxu0 0.0
        %1062 = vmatprep.subr.mxu0 0.0
        %1063 = vmatpush1.xpose.msra.mxu0 0.0
        %1064 = vmatprep.subr.mxu0 0.0
        %1065 = vmatpush1.xpose.msra.mxu0 0.0
        %1066 = vmatprep.subr.mxu0 0.0
        %1067 = vmatpush1.xpose.msra.mxu0 0.0
        %1068 = vmatprep.subr.mxu0 0.0
        %1069 = vmatpush1.xpose.msra.mxu0 0.0
        %1070 = vmatprep.subr.mxu0 0.0
        %1071 = vmatpush1.xpose.msra.mxu0 0.0
        %1072 = vmatprep.subr.mxu0 0.0
        %1073 = vmatpush1.xpose.msra.mxu0 0.0
        %1074 = vmatprep.subr.mxu0 0.0
        %1075 = vmatpush1.xpose.msra.mxu0 0.0
        %1076 = vmatprep.subr.mxu0 0.0
        %1077 = vmatpush1.xpose.msra.mxu0 0.0
        %1078 = vmatprep.subr.mxu0 0.0
        %1079 = vmatpush1.xpose.msra.mxu0 0.0
        %1080 = vmatprep.subr.mxu0 0.0
        %1081 = vmatpush1.xpose.msra.mxu0 0.0
        %1082 = vmatprep.subr.mxu0 0.0
        %1083 = vmatpush1.xpose.msra.mxu0 0.0
        %1084 = vmatprep.subr.mxu0 0.0
        %1085 = vmatpush1.xpose.msra.mxu0 0.0
        %1086 = vmatprep.subr.mxu0 0.0
        %1087 = vmatpush1.xpose.msra.mxu0 0.0
        %1088 = vmatprep.subr.mxu0 0.0
        %1089 = vmatpush1.xpose.msra.mxu0 0.0
        %1090 = vmatprep.subr.mxu0 0.0
        %1091 = vmatpush1.xpose.msra.mxu0 0.0
        %1092 = vmatprep.subr.mxu0 0.0
        %1093 = vmatpush1.xpose.msra.mxu0 0.0
        %1094 = vmatprep.subr.mxu0 0.0
        %1095 = vmatpush1.xpose.msra.mxu0 0.0
        %1096 = vmatprep.subr.mxu0 0.0
        %1097 = vmatpush1.xpose.msra.mxu0 0.0
        %1098 = vmatprep.subr.mxu0 0.0
        %1099 = vmatpush1.xpose.msra.mxu0 0.0
        %1100 = vmatprep.subr.mxu0 0.0
        %1101 = vmatpush1.xpose.msra.mxu0 0.0
        %1102 = vmatprep.mubr.f32.mxu0 0.0
        %1103 = vmatmul.mubr.f32.gmra.mrb[0].mxu0 %v1034
        %v1104 = vpop.f32.mrb[0].mxu0
        %v1105 = vadd.f32 0.0, %v1104
        %v1106 = vpop.f32.mrb[0].mxu0
        %1107 = vdwg.mxu0
        %v1108 = vsel %vm703, %v1105, -inf
        %1109 = vmax.xlane.f32.xlu0 %v1108
        %v1110 = vpop.xlane.xlu0 %1109
        %v1111 = vsub.f32 %v1105, %v1110
        %v1112 = vmul.f32 %v1111, 1.442695
        %v1113 = vpow.pop %v1112
        %v1114 = vsel %vm703, %v1113, 0.0
        %1115 = vadd.xlane.f32.xlu0 %v1114
        %v1116 = vpop.xlane.xlu0 %1115
        %v1117 = vrcp.pop %v1116
        %v1118 = vmul.f32 %v1113, %v1117
        %1119 = vrot.lane.b32.xlu0 %v697, 48
        %v1120 = vpop.permute.xlu0 %1119
        %v1123 = vsel %vm703, %v1118, 0
        %1125 = vmatprep.subr.mxu0 0.0
        %1126 = vmatpush1.msra.mxu0 %v1120
        %1127 = vmatprep.subr.mxu0 0.0
        %1128 = vmatpush1.msra.mxu0 0.0
        %1129 = vmatprep.subr.mxu0 0.0
        %1130 = vmatpush1.msra.mxu0 0.0
        %1131 = vmatprep.subr.mxu0 0.0
        %1132 = vmatpush1.msra.mxu0 0.0
        %1133 = vmatprep.subr.mxu0 0.0
        %1134 = vmatpush1.msra.mxu0 0.0
        %1135 = vmatprep.subr.mxu0 0.0
        %1136 = vmatpush1.msra.mxu0 0.0
        %1137 = vmatprep.subr.mxu0 0.0
        %1138 = vmatpush1.msra.mxu0 0.0
        %1139 = vmatprep.subr.mxu0 0.0
        %1140 = vmatpush1.msra.mxu0 0.0
        %1141 = vmatprep.subr.mxu0 0.0
        %1142 = vmatpush1.msra.mxu0 0.0
        %1143 = vmatprep.subr.mxu0 0.0
        %1144 = vmatpush1.msra.mxu0 0.0
        %1145 = vmatprep.subr.mxu0 0.0
        %1146 = vmatpush1.msra.mxu0 0.0
        %1147 = vmatprep.subr.mxu0 0.0
        %1148 = vmatpush1.msra.mxu0 0.0
        %1149 = vmatprep.subr.mxu0 0.0
        %1150 = vmatpush1.msra.mxu0 0.0
        %1151 = vmatprep.subr.mxu0 0.0
        %1152 = vmatpush1.msra.mxu0 0.0
        %1153 = vmatprep.subr.mxu0 0.0
        %1154 = vmatpush1.msra.mxu0 0.0
        %1155 = vmatprep.subr.mxu0 0.0
        %1156 = vmatpush1.msra.mxu0 0.0
        %1157 = vmatprep.subr.mxu0 0.0
        %1158 = vmatpush1.msra.mxu0 0.0
        %1159 = vmatprep.subr.mxu0 0.0
        %1160 = vmatpush1.msra.mxu0 0.0
        %1161 = vmatprep.subr.mxu0 0.0
        %1162 = vmatpush1.msra.mxu0 0.0
        %1163 = vmatprep.subr.mxu0 0.0
        %1164 = vmatpush1.msra.mxu0 0.0
        %1165 = vmatprep.subr.mxu0 0.0
        %1166 = vmatpush1.msra.mxu0 0.0
        %1167 = vmatprep.subr.mxu0 0.0
        %1168 = vmatpush1.msra.mxu0 0.0
        %1169 = vmatprep.subr.mxu0 0.0
        %1170 = vmatpush1.msra.mxu0 0.0
        %1171 = vmatprep.subr.mxu0 0.0
        %1172 = vmatpush1.msra.mxu0 0.0
        %1173 = vmatprep.subr.mxu0 0.0
        %1174 = vmatpush1.msra.mxu0 0.0
        %1175 = vmatprep.subr.mxu0 0.0
        %1176 = vmatpush1.msra.mxu0 0.0
        %1177 = vmatprep.subr.mxu0 0.0
        %1178 = vmatpush1.msra.mxu0 0.0
        %1179 = vmatprep.subr.mxu0 0.0
        %1180 = vmatpush1.msra.mxu0 0.0
        %1181 = vmatprep.subr.mxu0 0.0
        %1182 = vmatpush1.msra.mxu0 0.0
        %1183 = vmatprep.subr.mxu0 0.0
        %1184 = vmatpush1.msra.mxu0 0.0
        %1185 = vmatprep.subr.mxu0 0.0
        %1186 = vmatpush1.msra.mxu0 0.0
        %1187 = vmatprep.subr.mxu0 0.0
        %1188 = vmatpush1.msra.mxu0 0.0
        %1189 = vmatprep.mubr.f32.mxu0 0.0
        %1190 = vmatmul.mubr.f32.gmra.mrb[0].mxu0 %v1123
        %v1191 = vpop.f32.mrb[0].mxu0
        %v1192 = vadd.f32 0.0, %v1191
        %v1193 = vpop.f32.mrb[0].mxu0
        %1194 = vdwg.mxu0
        %1195 = vrot.lane.b32.xlu0 %v697, 104
        %v1196 = vpop.permute.xlu0 %1195
        %1197 = vrot.lane.b32.xlu0 %v697, 72
        %v1198 = vpop.permute.xlu0 %1197
        %v1199 = vsel %vm703, %v1196, 0
        %v1201 = vsel %vm703, %v1198, 0
        %1203 = vmatprep.subr.mxu0 0.0
        %1204 = vmatpush1.xpose.msra.mxu0 %v1201
        %1205 = vmatprep.subr.mxu0 0.0
        %1206 = vmatpush1.xpose.msra.mxu0 0.0
        %1207 = vmatprep.subr.mxu0 0.0
        %1208 = vmatpush1.xpose.msra.mxu0 0.0
        %1209 = vmatprep.subr.mxu0 0.0
        %1210 = vmatpush1.xpose.msra.mxu0 0.0
        %1211 = vmatprep.subr.mxu0 0.0
        %1212 = vmatpush1.xpose.msra.mxu0 0.0
        %1213 = vmatprep.subr.mxu0 0.0
        %1214 = vmatpush1.xpose.msra.mxu0 0.0
        %1215 = vmatprep.subr.mxu0 0.0
        %1216 = vmatpush1.xpose.msra.mxu0 0.0
        %1217 = vmatprep.subr.mxu0 0.0
        %1218 = vmatpush1.xpose.msra.mxu0 0.0
        %1219 = vmatprep.subr.mxu0 0.0
        %1220 = vmatpush1.xpose.msra.mxu0 0.0
        %1221 = vmatprep.subr.mxu0 0.0
        %1222 = vmatpush1.xpose.msra.mxu0 0.0
        %1223 = vmatprep.subr.mxu0 0.0
        %1224 = vmatpush1.xpose.msra.mxu0 0.0
        %1225 = vmatprep.subr.mxu0 0.0
        %1226 = vmatpush1.xpose.msra.mxu0 0.0
        %1227 = vmatprep.subr.mxu0 0.0
        %1228 = vmatpush1.xpose.msra.mxu0 0.0
        %1229 = vmatprep.subr.mxu0 0.0
        %1230 = vmatpush1.xpose.msra.mxu0 0.0
        %1231 = vmatprep.subr.mxu0 0.0
        %1232 = vmatpush1.xpose.msra.mxu0 0.0
        %1233 = vmatprep.subr.mxu0 0.0
        %1234 = vmatpush1.xpose.msra.mxu0 0.0
        %1235 = vmatprep.subr.mxu0 0.0
        %1236 = vmatpush1.xpose.msra.mxu0 0.0
        %1237 = vmatprep.subr.mxu0 0.0
        %1238 = vmatpush1.xpose.msra.mxu0 0.0
        %1239 = vmatprep.subr.mxu0 0.0
        %1240 = vmatpush1.xpose.msra.mxu0 0.0
        %1241 = vmatprep.subr.mxu0 0.0
        %1242 = vmatpush1.xpose.msra.mxu0 0.0
        %1243 = vmatprep.subr.mxu0 0.0
        %1244 = vmatpush1.xpose.msra.mxu0 0.0
        %1245 = vmatprep.subr.mxu0 0.0
        %1246 = vmatpush1.xpose.msra.mxu0 0.0
        %1247 = vmatprep.subr.mxu0 0.0
        %1248 = vmatpush1.xpose.msra.mxu0 0.0
        %1249 = vmatprep.subr.mxu0 0.0
        %1250 = vmatpush1.xpose.msra.mxu0 0.0
        %1251 = vmatprep.subr.mxu0 0.0
        %1252 = vmatpush1.xpose.msra.mxu0 0.0
        %1253 = vmatprep.subr.mxu0 0.0
        %1254 = vmatpush1.xpose.msra.mxu0 0.0
        %1255 = vmatprep.subr.mxu0 0.0
        %1256 = vmatpush1.xpose.msra.mxu0 0.0
        %1257 = vmatprep.subr.mxu0 0.0
        %1258 = vmatpush1.xpose.msra.mxu0 0.0
        %1259 = vmatprep.subr.mxu0 0.0
        %1260 = vmatpush1.xpose.msra.mxu0 0.0
        %1261 = vmatprep.subr.mxu0 0.0
        %1262 = vmatpush1.xpose.msra.mxu0 0.0
        %1263 = vmatprep.subr.mxu0 0.0
        %1264 = vmatpush1.xpose.msra.mxu0 0.0
        %1265 = vmatprep.subr.mxu0 0.0
        %1266 = vmatpush1.xpose.msra.mxu0 0.0
        %1267 = vmatprep.mubr.f32.mxu0 0.0
        %1268 = vmatmul.mubr.f32.gmra.mrb[0].mxu0 %v1199
        %v1269 = vpop.f32.mrb[0].mxu0
        %v1270 = vadd.f32 0.0, %v1269
        %v1271 = vpop.f32.mrb[0].mxu0
        %1272 = vdwg.mxu0
        %v1273 = vsel %vm703, %v1270, -inf
        %1274 = vmax.xlane.f32.xlu0 %v1273
        %v1275 = vpop.xlane.xlu0 %1274
        %v1276 = vsub.f32 %v1270, %v1275
        %v1277 = vmul.f32 %v1276, 1.442695
        %v1278 = vpow.pop %v1277
        %v1279 = vsel %vm703, %v1278, 0.0
        %1280 = vadd.xlane.f32.xlu0 %v1279
        %v1281 = vpop.xlane.xlu0 %1280
        %v1282 = vrcp.pop %v1281
        %v1283 = vmul.f32 %v1278, %v1282
        %1284 = vrot.lane.b32.xlu0 %v697, 40
        %v1285 = vpop.permute.xlu0 %1284
        %v1288 = vsel %vm703, %v1283, 0
        %1290 = vmatprep.subr.mxu0 0.0
        %1291 = vmatpush1.msra.mxu0 %v1285
        %1292 = vmatprep.subr.mxu0 0.0
        %1293 = vmatpush1.msra.mxu0 0.0
        %1294 = vmatprep.subr.mxu0 0.0
        %1295 = vmatpush1.msra.mxu0 0.0
        %1296 = vmatprep.subr.mxu0 0.0
        %1297 = vmatpush1.msra.mxu0 0.0
        %1298 = vmatprep.subr.mxu0 0.0
        %1299 = vmatpush1.msra.mxu0 0.0
        %1300 = vmatprep.subr.mxu0 0.0
        %1301 = vmatpush1.msra.mxu0 0.0
        %1302 = vmatprep.subr.mxu0 0.0
        %1303 = vmatpush1.msra.mxu0 0.0
        %1304 = vmatprep.subr.mxu0 0.0
        %1305 = vmatpush1.msra.mxu0 0.0
        %1306 = vmatprep.subr.mxu0 0.0
        %1307 = vmatpush1.msra.mxu0 0.0
        %1308 = vmatprep.subr.mxu0 0.0
        %1309 = vmatpush1.msra.mxu0 0.0
        %1310 = vmatprep.subr.mxu0 0.0
        %1311 = vmatpush1.msra.mxu0 0.0
        %1312 = vmatprep.subr.mxu0 0.0
        %1313 = vmatpush1.msra.mxu0 0.0
        %1314 = vmatprep.subr.mxu0 0.0
        %1315 = vmatpush1.msra.mxu0 0.0
        %1316 = vmatprep.subr.mxu0 0.0
        %1317 = vmatpush1.msra.mxu0 0.0
        %1318 = vmatprep.subr.mxu0 0.0
        %1319 = vmatpush1.msra.mxu0 0.0
        %1320 = vmatprep.subr.mxu0 0.0
        %1321 = vmatpush1.msra.mxu0 0.0
        %1322 = vmatprep.subr.mxu0 0.0
        %1323 = vmatpush1.msra.mxu0 0.0
        %1324 = vmatprep.subr.mxu0 0.0
        %1325 = vmatpush1.msra.mxu0 0.0
        %1326 = vmatprep.subr.mxu0 0.0
        %1327 = vmatpush1.msra.mxu0 0.0
        %1328 = vmatprep.subr.mxu0 0.0
        %1329 = vmatpush1.msra.mxu0 0.0
        %1330 = vmatprep.subr.mxu0 0.0
        %1331 = vmatpush1.msra.mxu0 0.0
        %1332 = vmatprep.subr.mxu0 0.0
        %1333 = vmatpush1.msra.mxu0 0.0
        %1334 = vmatprep.subr.mxu0 0.0
        %1335 = vmatpush1.msra.mxu0 0.0
        %1336 = vmatprep.subr.mxu0 0.0
        %1337 = vmatpush1.msra.mxu0 0.0
        %1338 = vmatprep.subr.mxu0 0.0
        %1339 = vmatpush1.msra.mxu0 0.0
        %1340 = vmatprep.subr.mxu0 0.0
        %1341 = vmatpush1.msra.mxu0 0.0
        %1342 = vmatprep.subr.mxu0 0.0
        %1343 = vmatpush1.msra.mxu0 0.0
        %1344 = vmatprep.subr.mxu0 0.0
        %1345 = vmatpush1.msra.mxu0 0.0
        %1346 = vmatprep.subr.mxu0 0.0
        %1347 = vmatpush1.msra.mxu0 0.0
        %1348 = vmatprep.subr.mxu0 0.0
        %1349 = vmatpush1.msra.mxu0 0.0
        %1350 = vmatprep.subr.mxu0 0.0
        %1351 = vmatpush1.msra.mxu0 0.0
        %1352 = vmatprep.subr.mxu0 0.0
        %1353 = vmatpush1.msra.mxu0 0.0
        %1354 = vmatprep.mubr.f32.mxu0 0.0
        %1355 = vmatmul.mubr.f32.gmra.mrb[0].mxu0 %v1288
        %v1356 = vpop.f32.mrb[0].mxu0
        %v1357 = vadd.f32 0.0, %v1356
        %v1358 = vpop.f32.mrb[0].mxu0
        %1359 = vdwg.mxu0
        %1361 = vrot.lane.b32.xlu0 %v1027, 8
        %v1362 = vpop.permute.xlu0 %1361
        %1365 = vrot.lane.b32.xlu0 %v1192, 16
        %v1366 = vpop.permute.xlu0 %1365
        %1369 = vrot.lane.b32.xlu0 %v1357, 24
        %v1370 = vpop.permute.xlu0 %1369
        %v1372 = vsel %vm703, %v862, %v1362
        %vm1373 = vcmask 130048
        %v1374 = vsel %vm1373, %v1372, %v1366
        %vm1375 = vcmask 195584
        %v1376 = vsel %vm1375, %v1374, %v1370
        %v1377 = vld [vmem:[#allocation8] sm:$0xff]
        %v1378 = vld [vmem:[#allocation8 + $0x8] sm:$0xff]
        %v1379 = vld [vmem:[#allocation8 + $0x10] sm:$0xff]
        %v1380 = vld [vmem:[#allocation8 + $0x18] sm:$0xff]
        %v1381 = vld [vmem:[#allocation10] sm:$0x1]
        %v1383 = vlaneseq
        %v1384 = vshrl.u32 %v1383, 7
        %v1385 = vsub.s32 0, %v1384
        %v1386 = vrot.slane %v1381, %v1385
        %v1389 = vsel %vm626, %v1376, 0
        %1391 = vmatprep.subr.mxu0 0.0
        %1392 = vmatpush1.msra.mxu0 %v1377
        %1393 = vmatprep.subr.mxu0 0.0
        %1394 = vmatpush1.msra.mxu0 %v1378
        %1395 = vmatprep.subr.mxu0 0.0
        %1396 = vmatpush1.msra.mxu0 %v1379
        %1397 = vmatprep.subr.mxu0 0.0
        %1398 = vmatpush1.msra.mxu0 %v1380
        %1399 = vmatprep.subr.mxu0 0.0
        %1400 = vmatpush1.msra.mxu0 0.0
        %1401 = vmatprep.subr.mxu0 0.0
        %1402 = vmatpush1.msra.mxu0 0.0
        %1403 = vmatprep.subr.mxu0 0.0
        %1404 = vmatpush1.msra.mxu0 0.0
        %1405 = vmatprep.subr.mxu0 0.0
        %1406 = vmatpush1.msra.mxu0 0.0
        %1407 = vmatprep.subr.mxu0 0.0
        %1408 = vmatpush1.msra.mxu0 0.0
        %1409 = vmatprep.subr.mxu0 0.0
        %1410 = vmatpush1.msra.mxu0 0.0
        %1411 = vmatprep.subr.mxu0 0.0
        %1412 = vmatpush1.msra.mxu0 0.0
        %1413 = vmatprep.subr.mxu0 0.0
        %1414 = vmatpush1.msra.mxu0 0.0
        %1415 = vmatprep.subr.mxu0 0.0
        %1416 = vmatpush1.msra.mxu0 0.0
        %1417 = vmatprep.subr.mxu0 0.0
        %1418 = vmatpush1.msra.mxu0 0.0
        %1419 = vmatprep.subr.mxu0 0.0
        %1420 = vmatpush1.msra.mxu0 0.0
        %1421 = vmatprep.subr.mxu0 0.0
        %1422 = vmatpush1.msra.mxu0 0.0
        %1423 = vmatprep.subr.mxu0 0.0
        %1424 = vmatpush1.msra.mxu0 0.0
        %1425 = vmatprep.subr.mxu0 0.0
        %1426 = vmatpush1.msra.mxu0 0.0
        %1427 = vmatprep.subr.mxu0 0.0
        %1428 = vmatpush1.msra.mxu0 0.0
        %1429 = vmatprep.subr.mxu0 0.0
        %1430 = vmatpush1.msra.mxu0 0.0
        %1431 = vmatprep.subr.mxu0 0.0
        %1432 = vmatpush1.msra.mxu0 0.0
        %1433 = vmatprep.subr.mxu0 0.0
        %1434 = vmatpush1.msra.mxu0 0.0
        %1435 = vmatprep.subr.mxu0 0.0
        %1436 = vmatpush1.msra.mxu0 0.0
        %1437 = vmatprep.subr.mxu0 0.0
        %1438 = vmatpush1.msra.mxu0 0.0
        %1439 = vmatprep.subr.mxu0 0.0
        %1440 = vmatpush1.msra.mxu0 0.0
        %1441 = vmatprep.subr.mxu0 0.0
        %1442 = vmatpush1.msra.mxu0 0.0
        %1443 = vmatprep.subr.mxu0 0.0
        %1444 = vmatpush1.msra.mxu0 0.0
        %1445 = vmatprep.subr.mxu0 0.0
        %1446 = vmatpush1.msra.mxu0 0.0
        %1447 = vmatprep.subr.mxu0 0.0
        %1448 = vmatpush1.msra.mxu0 0.0
        %1449 = vmatprep.subr.mxu0 0.0
        %1450 = vmatpush1.msra.mxu0 0.0
        %1451 = vmatprep.subr.mxu0 0.0
        %1452 = vmatpush1.msra.mxu0 0.0
        %1453 = vmatprep.subr.mxu0 0.0
        %1454 = vmatpush1.msra.mxu0 0.0
        %1455 = vmatprep.mubr.f32.mxu0 0.0
        %1456 = vmatmul.mubr.f32.gmra.mrb[0].mxu0 %v1389
        %v1457 = vpop.f32.mrb[0].mxu0
        %v1458 = vadd.f32 %v1386, %v1457
        %v1459 = vpop.f32.mrb[0].mxu0
        %1460 = vdwg.mxu0
        %v1461 = vadd.f32 %v614, %v1458
        %v1462 = vsel %vm626, %v1461, 0.0
        %1463 = vadd.xlane.f32.xlu0 %v1462
        %v1464 = vpop.xlane.xlu0 %1463
        %v1465 = vrcp.pop 32.0
        %v1466 = vmul.f32 %v1464, %v1465
        %v1467 = vsub.f32 %v1461, %v1466
        %v1468 = vmul.f32 %v1467, %v1467
        %v1469 = vsel %vm626, %v1468, 0.0
        %1470 = vadd.xlane.f32.xlu0 %v1469
        %v1471 = vpop.xlane.xlu0 %1470
        %v1472 = vmul.f32 %v1471, %v1465
        %v1473 = vadd.f32 %v1472, 1e-05
        %v1474 = vrsqrt.pop %v1473
        %v1475 = vmul.f32 %v1467, %v1474
        %v1476 = vld [vmem:[#allocation17] sm:$0x1]
        %v1478 = vlaneseq
        %v1479 = vshrl.u32 %v1478, 7
        %v1480 = vsub.s32 0, %v1479
        %v1481 = vrot.slane %v1476, %v1480
        %v1483 = vmul.f32 %v1475, %v1481
        %v1484 = vld [vmem:[#allocation19] sm:$0x1]
        %v1486 = vlaneseq
        %v1487 = vshrl.u32 %v1486, 7
        %v1488 = vsub.s32 0, %v1487
        %v1489 = vrot.slane %v1484, %v1488
        %v1491 = vadd.f32 %v1483, %v1489
        %v1492 = vld [vmem:[#allocation11] sm:$0xff]
        %v1493 = vld [vmem:[#allocation11 + $0x8] sm:$0xff]
        %v1494 = vld [vmem:[#allocation11 + $0x10] sm:$0xff]
        %v1495 = vld [vmem:[#allocation11 + $0x18] sm:$0xff]
        %v1496 = vld [vmem:[#allocation13] sm:$0x1]
        %v1498 = vlaneseq
        %v1499 = vshrl.u32 %v1498, 7
        %v1500 = vsub.s32 0, %v1499
        %v1501 = vrot.slane %v1496, %v1500
        %v1504 = vsel %vm626, %v1491, 0
        %1506 = vmatprep.subr.mxu0 0.0
        %1507 = vmatpush1.msra.mxu0 %v1492
        %1508 = vmatprep.subr.mxu0 0.0
        %1509 = vmatpush1.msra.mxu0 %v1493
        %1510 = vmatprep.subr.mxu0 0.0
        %1511 = vmatpush1.msra.mxu0 %v1494
        %1512 = vmatprep.subr.mxu0 0.0
        %1513 = vmatpush1.msra.mxu0 %v1495
        %1514 = vmatprep.subr.mxu0 0.0
        %1515 = vmatpush1.msra.mxu0 0.0
        %1516 = vmatprep.subr.mxu0 0.0
        %1517 = vmatpush1.msra.mxu0 0.0
        %1518 = vmatprep.subr.mxu0 0.0
        %1519 = vmatpush1.msra.mxu0 0.0
        %1520 = vmatprep.subr.mxu0 0.0
        %1521 = vmatpush1.msra.mxu0 0.0
        %1522 = vmatprep.subr.mxu0 0.0
        %1523 = vmatpush1.msra.mxu0 0.0
        %1524 = vmatprep.subr.mxu0 0.0
        %1525 = vmatpush1.msra.mxu0 0.0
        %1526 = vmatprep.subr.mxu0 0.0
        %1527 = vmatpush1.msra.mxu0 0.0
        %1528 = vmatprep.subr.mxu0 0.0
        %1529 = vmatpush1.msra.mxu0 0.0
        %1530 = vmatprep.subr.mxu0 0.0
        %1531 = vmatpush1.msra.mxu0 0.0
        %1532 = vmatprep.subr.mxu0 0.0
        %1533 = vmatpush1.msra.mxu0 0.0
        %1534 = vmatprep.subr.mxu0 0.0
        %1535 = vmatpush1.msra.mxu0 0.0
        %1536 = vmatprep.subr.mxu0 0.0
        %1537 = vmatpush1.msra.mxu0 0.0
        %1538 = vmatprep.subr.mxu0 0.0
        %1539 = vmatpush1.msra.mxu0 0.0
        %1540 = vmatprep.subr.mxu0 0.0
        %1541 = vmatpush1.msra.mxu0 0.0
        %1542 = vmatprep.subr.mxu0 0.0
        %1543 = vmatpush1.msra.mxu0 0.0
        %1544 = vmatprep.subr.mxu0 0.0
        %1545 = vmatpush1.msra.mxu0 0.0
        %1546 = vmatprep.subr.mxu0 0.0
        %1547 = vmatpush1.msra.mxu0 0.0
        %1548 = vmatprep.subr.mxu0 0.0
        %1549 = vmatpush1.msra.mxu0 0.0
        %1550 = vmatprep.subr.mxu0 0.0
        %1551 = vmatpush1.msra.mxu0 0.0
        %1552 = vmatprep.subr.mxu0 0.0
        %1553 = vmatpush1.msra.mxu0 0.0
        %1554 = vmatprep.subr.mxu0 0.0
        %1555 = vmatpush1.msra.mxu0 0.0
        %1556 = vmatprep.subr.mxu0 0.0
        %1557 = vmatpush1.msra.mxu0 0.0
        %1558 = vmatprep.subr.mxu0 0.0
        %1559 = vmatpush1.msra.mxu0 0.0
        %1560 = vmatprep.subr.mxu0 0.0
        %1561 = vmatpush1.msra.mxu0 0.0
        %1562 = vmatprep.subr.mxu0 0.0
        %1563 = vmatpush1.msra.mxu0 0.0
        %1564 = vmatprep.subr.mxu0 0.0
        %1565 = vmatpush1.msra.mxu0 0.0
        %1566 = vmatprep.subr.mxu0 0.0
        %1567 = vmatpush1.msra.mxu0 0.0
        %1568 = vmatprep.subr.mxu0 0.0
        %1569 = vmatpush1.msra.mxu0 0.0
        %1570 = vmatprep.mubr.f32.mxu0 0.0
        %1571 = vmatmul.mubr.f32.gmra.mrb[0].mxu0 %v1504
        %v1572 = vpop.f32.mrb[0].mxu0
        %v1573 = vadd.f32 %v1501, %v1572
        %v1574 = vpop.f32.mrb[0].mxu0
        %1575 = vdwg.mxu0
        %v1576 = vmax.f32 %v1573, 0.0
        %v1577 = vld [vmem:[#allocation14] sm:$0xff]
        %v1578 = vld [vmem:[#allocation14 + $0x8] sm:$0xff]
        %v1579 = vld [vmem:[#allocation14 + $0x10] sm:$0xff]
        %v1580 = vld [vmem:[#allocation14 + $0x18] sm:$0xff]
        %v1581 = vld [vmem:[#allocation14 + $0x20] sm:$0xff]
        %v1582 = vld [vmem:[#allocation14 + $0x28] sm:$0xff]
        %v1583 = vld [vmem:[#allocation14 + $0x30] sm:$0xff]
        %v1584 = vld [vmem:[#allocation14 + $0x38] sm:$0xff]
        %v1585 = vld [vmem:[#allocation16] sm:$0x1]
        %v1587 = vlaneseq
        %v1588 = vshrl.u32 %v1587, 7
        %v1589 = vsub.s32 0, %v1588
        %v1590 = vrot.slane %v1585, %v1589
        %vm1592 = vcmask 523264
        %v1594 = vsel %vm1592, %v1576, 0
        %1596 = vmatprep.subr.mxu0 0.0
        %1597 = vmatpush1.msra.mxu0 %v1577
        %1598 = vmatprep.subr.mxu0 0.0
        %1599 = vmatpush1.msra.mxu0 %v1578
        %1600 = vmatprep.subr.mxu0 0.0
        %1601 = vmatpush1.msra.mxu0 %v1579
        %1602 = vmatprep.subr.mxu0 0.0
        %1603 = vmatpush1.msra.mxu0 %v1580
        %1604 = vmatprep.subr.mxu0 0.0
        %1605 = vmatpush1.msra.mxu0 %v1581
        %1606 = vmatprep.subr.mxu0 0.0
        %1607 = vmatpush1.msra.mxu0 %v1582
        %1608 = vmatprep.subr.mxu0 0.0
        %1609 = vmatpush1.msra.mxu0 %v1583
        %1610 = vmatprep.subr.mxu0 0.0
        %1611 = vmatpush1.msra.mxu0 %v1584
        %1612 = vmatprep.subr.mxu0 0.0
        %1613 = vmatpush1.msra.mxu0 0.0
        %1614 = vmatprep.subr.mxu0 0.0
        %1615 = vmatpush1.msra.mxu0 0.0
        %1616 = vmatprep.subr.mxu0 0.0
        %1617 = vmatpush1.msra.mxu0 0.0
        %1618 = vmatprep.subr.mxu0 0.0
        %1619 = vmatpush1.msra.mxu0 0.0
        %1620 = vmatprep.subr.mxu0 0.0
        %1621 = vmatpush1.msra.mxu0 0.0
        %1622 = vmatprep.subr.mxu0 0.0
        %1623 = vmatpush1.msra.mxu0 0.0
        %1624 = vmatprep.subr.mxu0 0.0
        %1625 = vmatpush1.msra.mxu0 0.0
        %1626 = vmatprep.subr.mxu0 0.0
        %1627 = vmatpush1.msra.mxu0 0.0
        %1628 = vmatprep.subr.mxu0 0.0
        %1629 = vmatpush1.msra.mxu0 0.0
        %1630 = vmatprep.subr.mxu0 0.0
        %1631 = vmatpush1.msra.mxu0 0.0
        %1632 = vmatprep.subr.mxu0 0.0
        %1633 = vmatpush1.msra.mxu0 0.0
        %1634 = vmatprep.subr.mxu0 0.0
        %1635 = vmatpush1.msra.mxu0 0.0
        %1636 = vmatprep.subr.mxu0 0.0
        %1637 = vmatpush1.msra.mxu0 0.0
        %1638 = vmatprep.subr.mxu0 0.0
        %1639 = vmatpush1.msra.mxu0 0.0
        %1640 = vmatprep.subr.mxu0 0.0
        %1641 = vmatpush1.msra.mxu0 0.0
        %1642 = vmatprep.subr.mxu0 0.0
        %1643 = vmatpush1.msra.mxu0 0.0
        %1644 = vmatprep.subr.mxu0 0.0
        %1645 = vmatpush1.msra.mxu0 0.0
        %1646 = vmatprep.subr.mxu0 0.0
        %1647 = vmatpush1.msra.mxu0 0.0
        %1648 = vmatprep.subr.mxu0 0.0
        %1649 = vmatpush1.msra.mxu0 0.0
        %1650 = vmatprep.subr.mxu0 0.0
        %1651 = vmatpush1.msra.mxu0 0.0
        %1652 = vmatprep.subr.mxu0 0.0
        %1653 = vmatpush1.msra.mxu0 0.0
        %1654 = vmatprep.subr.mxu0 0.0
        %1655 = vmatpush1.msra.mxu0 0.0
        %1656 = vmatprep.subr.mxu0 0.0
        %1657 = vmatpush1.msra.mxu0 0.0
        %1658 = vmatprep.subr.mxu0 0.0
        %1659 = vmatpush1.msra.mxu0 0.0
        %1660 = vmatprep.mubr.f32.mxu0 0.0
        %1661 = vmatmul.mubr.f32.gmra.mrb[0].mxu0 %v1594
        %v1662 = vpop.f32.mrb[0].mxu0
        %v1663 = vadd.f32 %v1590, %v1662
        %v1664 = vpop.f32.mrb[0].mxu0
        %1665 = vdwg.mxu0
        %v1666 = vadd.f32 %v1491, %v1663
        %v1667 = vsel %vm626, %v1666, 0.0
        %1668 = vadd.xlane.f32.xlu0 %v1667
        %v1669 = vpop.xlane.xlu0 %1668
        %v1670 = vmul.f32 %v1669, %v1465
        %v1671 = vsub.f32 %v1666, %v1670
        %v1672 = vmul.f32 %v1671, %v1671
        %v1673 = vsel %vm626, %v1672, 0.0
        %1674 = vadd.xlane.f32.xlu0 %v1673
        %v1675 = vpop.xlane.xlu0 %1674
        %v1676 = vmul.f32 %v1675, %v1465
        %v1677 = vadd.f32 %v1676, 1e-05
        %v1678 = vrsqrt.pop %v1677
        %v1679 = vmul.f32 %v1671, %v1678
        %v1680 = vld [vmem:[#allocation20] sm:$0x1]
        %v1682 = vlaneseq
        %v1683 = vshrl.u32 %v1682, 7
        %v1684 = vsub.s32 0, %v1683
        %v1685 = vrot.slane %v1680, %v1684
        %v1687 = vmul.f32 %v1679, %v1685
        %v1688 = vld [vmem:[#allocation22] sm:$0x1]
        %v1690 = vlaneseq
        %v1691 = vshrl.u32 %v1690, 7
        %v1692 = vsub.s32 0, %v1691
        %v1693 = vrot.slane %v1688, %v1692
        %v1695 = vadd.f32 %v1687, %v1693
        %1696 = vst.msk [vmem:[%s613] sm:$0xff] %vm626, %v1695
        %s1697 = sand.u32 %s322, 1
        %s1698 = scalar_lea.sflag [#allocation4], %s1697
        %s1699 = sand.u32 %s322, 1
        %s1700 = smul.addr %s1699, 8
        %s1701 = scalar_lea.vmem [#allocation23], %s1700
        // Predicated region
        $region125: #{tpu_custom_call.1} parent=71 // pred_check
          %p1702 = pneg %p332
        $region126: #{tpu_custom_call.1} parent=71 // pred_check_branch
          %1704 = sbr.rel (%p1702) target = $region128
        $region127: #{tpu_custom_call.1} parent=71 // pred_region
          %s1706 = ssub.s32 128, 128
          %1707 = vsyncadd %s1698, %s1706
          %s1708 = smul.addr %s36, 128
          %s1709 = scalar_lea.hbm %s13, %s1708
          %s1711 = sshll.u32 %s1701, 4
          %s1712 = int_to_ptr.vmem [resolvable:$true] %s1711
          %1714 = dma.vmem_to_hbm [thread:$0]  %s1712, 128, %s1709, %s1698
        $region128: #{tpu_custom_call.1} parent=71 // pred_fallthru
          _
      $region72: #{tpu_custom_call.1} parent=5 // pred_fallthru
        _
      %p1715 = scmp.le.s32.totalorder 2, %s31
      // Predicated region
      $region129: #{tpu_custom_call.1} parent=5 // pred_check
        %p1716 = pneg %p1715
      $region130: #{tpu_custom_call.1} parent=5 // pred_check_branch
        %1718 = sbr.rel (%p1716) target = $region132
      $region131: #{tpu_custom_call.1} parent=5 // pred_region
        %s1719 = ssub.s32 %s31, 2
        // Predicated region
        $region133: #{tpu_custom_call.1} parent=131 // pred_check
          %p1720 = pneg %p338
        $region134: #{tpu_custom_call.1} parent=131 // pred_check_branch
          %1722 = sbr.rel (%p1720) target = $region136
        $region135: #{tpu_custom_call.1} parent=131 // pred_region
          %s1723 = sand.u32 %s323, 1
          %s1724 = scalar_lea.sflag [#allocation4], %s1723
          %s1725 = sand.u32 %s323, 1
          %s1726 = smul.addr %s1725, 8
          %s1727 = scalar_lea.vmem [#allocation23], %s1726
          %1728 = dma.done %s1724, 128
        $region136: #{tpu_custom_call.1} parent=131 // pred_fallthru
          _
      $region132: #{tpu_custom_call.1} parent=5 // pred_fallthru
        _
    $region6: #{tpu_custom_call.1} parent=1 // loop_footer
      %s35 = sadd.s32 1, %s31
    $region7: #{tpu_custom_call.1} parent=1 // loop_footer_branch
      %30 = sbr.rel target = $region3
    $region8: #{tpu_custom_call.1} parent=1 // loop_exit
      _
    %1729 = vsyncpa [#allocation3], 1
    %s1730 = scalar_lea.sflag [#allocation3], 1
    %1731 = vsyncpa %s1730, 1
    %1732 = vsyncpa [#allocation6], 1
    %1733 = vsyncpa [#allocation9], 1
    %1734 = vsyncpa [#allocation12], 1
    %1735 = vsyncpa [#allocation15], 1
    %1736 = vsyncpa [#allocation18], 1
    %1737 = vsyncpa [#allocation21], 1
    %1738 = vsyncpa [#allocation4], 1
    %s1739 = scalar_lea.sflag [#allocation4], 1
    %1740 = vsyncpa %s1739, 1

</llo_original>
